<compile_context>
chip_gen: v7x
topology: tpu7x:2x2x1
jax: 0.10.0
libtpu: 0.0.40
codegen_flags: <defaults>
</compile_context>

<pallas_src>
import functools

import jax
import jax.numpy as jnp
from jax.experimental import pallas as pl
from jax.experimental.pallas import tpu as pltpu


_SQRT_2_OVER_PI = 0.7978845608028654


def _gelu_tanh(x):
    # TODO(synk): PyTorch F.gelu defaults to the exact erf-based GELU; Mosaic has no
    # guaranteed erf lowering, so we use the standard tanh approximation (|err| < 1e-3).
    return 0.5 * x * (1.0 + jnp.tanh(_SQRT_2_OVER_PI * (x + 0.044715 * x * x * x)))


def _device_vmem_bytes():
    """Physical VMEM capacity of the attached TPU, with a conservative fallback."""
    try:
        info = pltpu.get_tpu_info()
        cap = int(getattr(info, "vmem_capacity_bytes", 0))
        if cap > 0:
            return cap
    except Exception:
        pass
    return 64 << 20  # v7x per-TC VMEM -- the smallest current part


# ----------------------------------------------------------------------------
# Fused FeedForward kernel (channels-as-contraction layout).
#   x_ref   : (1, dim, block_hw)          pixel tile of one image (compute dtype)
#   whg_ref : (2, block_inner, dim)       [Wh ; Wg] slice along inner (compute dtype)
#   w2_ref  : (dim_out, block_inner)      output 1x1 conv weight slice
#   bhg_ref : (2, block_inner, 1)         [bh ; bg] slice (f32)
#   b2_ref  : (dim_out, 1)                output bias (f32)
#   o_ref   : (1, dim_out, block_hw)
#   acc_ref : (dim_out, block_hw) f32     VMEM accumulator across the inner axis
# ----------------------------------------------------------------------------
def _ffn_geglu_kernel(x_ref, whg_ref, w2_ref, bhg_ref, b2_ref, o_ref, acc_ref,
                      *, compute_dtype):
    k = pl.program_id(2)

    @pl.when(k == 0)
    def _init():
        acc_ref[...] = jnp.zeros_like(acc_ref)

    x = x_ref[0]                                                    # (dim, block_hw)

    h = jnp.dot(whg_ref[0], x, preferred_element_type=jnp.float32)
    h = h + bhg_ref[0].astype(jnp.float32)                          # (block_inner, block_hw)
    g = jnp.dot(whg_ref[1], x, preferred_element_type=jnp.float32)
    g = g + bhg_ref[1].astype(jnp.float32)

    act = (h * _gelu_tanh(g)).astype(compute_dtype)                 # GEGLU chunk, VMEM only
    acc_ref[...] += jnp.dot(w2_ref[...], act, preferred_element_type=jnp.float32)

    @pl.when(k == pl.num_programs(2) - 1)
    def _store():
        out = acc_ref[...] + b2_ref[...].astype(jnp.float32)        # (dim_out, block_hw)
        o_ref[0] = out.astype(o_ref.dtype)


def feed_forward(x_nchw, params, *, block_hw=512, block_inner=1024,
                 compute_dtype=jnp.bfloat16):
    """FeedForward forward pass.  x_nchw: (N, dim, H, W) -> (N, dim_out, H, W)."""
    N, C, H, W = x_nchw.shape
    wh, wg, w2 = params["wh"], params["wg"], params["w2"]
    bh, bg, b2 = params["bh"], params["bg"], params["b2"]
    dim, inner = wh.shape
    dim_out = w2.shape[1]
    assert C == dim and wg.shape == (dim, inner) and w2.shape == (inner, dim_out)

    out_dtype = x_nchw.dtype
    cdtype = jnp.dtype(compute_dtype)
    cbytes = cdtype.itemsize
    obytes = jnp.dtype(out_dtype).itemsize

    # Pixel-tile size: multiple of 128 lanes, no larger than the padded pixel count.
    hw = H * W
    block_hw = max(128, (block_hw // 128) * 128)
    block_hw = min(block_hw, pl.cdiv(hw, 128) * 128)
    HWp = pl.cdiv(hw, block_hw) * block_hw

    # Inner (GEGLU) chunk size: multiple of 128, no larger than the padded inner dim.
    block_inner = max(128, (block_inner // 128) * 128)
    block_inner = min(block_inner, pl.cdiv(inner, 128) * 128)
    inner_p = pl.cdiv(inner, block_inner) * block_inner

    # Native-layout input: free reshape (+ cast to the MXU operand dtype).
    x3 = x_nchw.reshape(N, dim, hw).astype(cdtype)
    if HWp != hw:
        x3 = jnp.pad(x3, ((0, 0), (0, 0), (0, HWp - hw)))

    # Weights: value/gate halves stacked into one DMA stream, pre-transposed for
    # the channels-as-contraction layout; biases stay f32.
    whg = jnp.stack([wh.T, wg.T], axis=0).astype(cdtype)            # (2, inner, dim)
    bhg = jnp.stack([bh.reshape(inner, 1), bg.reshape(inner, 1)],
                    axis=0).astype(jnp.float32)                     # (2, inner, 1)
    w2t = w2.T.astype(cdtype)                                       # (dim_out, inner)
    b2c = b2.reshape(dim_out, 1).astype(jnp.float32)
    if inner_p != inner:                                            # zero chunk contributes 0
        pad = inner_p - inner
        whg = jnp.pad(whg, ((0, 0), (0, pad), (0, 0)))
        bhg = jnp.pad(bhg, ((0, 0), (0, pad), (0, 0)))
        w2t = jnp.pad(w2t, ((0, 0), (0, pad)))

    n_hw = HWp // block_hw
    n_k = inner_p // block_inner

    # VMEM budget: double-buffered tiles + one accumulator + chunked f32 intermediates.
    vmem_est = (
        2 * dim * block_hw * cbytes                                 # x tile
        + 2 * (2 * block_inner * dim * cbytes)                      # Wh|Wg slice
        + 2 * (dim_out * block_inner * cbytes)                      # W2 slice
        + 2 * (2 * block_inner * 128 * 4)                           # bh|bg slice (lane-padded)
        + 2 * (dim_out * 128 * 4)                                   # b2 (lane-padded)
        + 2 * dim_out * block_hw * obytes                           # out tile
        + dim_out * block_hw * 4                                    # f32 accumulator
        + 3 * block_inner * block_hw * 4                            # h, g, act chunks
        + (4 << 20)                                                 # headroom
    )
    vmem_limit = int(min(max(vmem_est, 16 << 20), int(0.9 * _device_vmem_bytes())))

    m_eff = N * HWp
    weight_bytes = (2 * inner_p * dim + dim_out * inner_p) * cbytes
    weight_streams = (N * n_hw) if n_k > 1 else 1                   # restream per M tile if tiled
    cost = pl.CostEstimate(
        flops=2 * m_eff * dim * inner_p * 2 + 2 * m_eff * inner_p * dim_out,
        transcendentals=m_eff * inner_p,
        bytes_accessed=(N * dim * HWp * cbytes
                        + weight_streams * weight_bytes
                        + (2 * inner_p + dim_out) * 4
                        + N * dim_out * HWp * obytes),
    )

    kernel = functools.partial(_ffn_geglu_kernel, compute_dtype=cdtype)
    out3 = pl.pallas_call(
        kernel,
        out_shape=jax.ShapeDtypeStruct((N, dim_out, HWp), out_dtype),
        grid=(N, n_hw, n_k),
        in_specs=[
            pl.BlockSpec((1, dim, block_hw), lambda n, i, k: (n, 0, i)),
            pl.BlockSpec((2, block_inner, dim), lambda n, i, k: (0, k, 0)),
            pl.BlockSpec((dim_out, block_inner), lambda n, i, k: (0, k)),
            pl.BlockSpec((2, block_inner, 1), lambda n, i, k: (0, k, 0)),
            pl.BlockSpec((dim_out, 1), lambda n, i, k: (0, 0)),
        ],
        out_specs=pl.BlockSpec((1, dim_out, block_hw), lambda n, i, k: (n, 0, i)),
        scratch_shapes=[pltpu.VMEM((dim_out, block_hw), jnp.float32)],
        compiler_params=pltpu.CompilerParams(
            dimension_semantics=("parallel", "parallel", "arbitrary"),
            vmem_limit_bytes=vmem_limit,
        ),
        cost_estimate=cost,
    )(x3, whg, w2t, bhg, b2c)

    return out3[:, :, :hw].reshape(N, dim_out, H, W)                # still NCHW, no transpose


# ----------------------------------------------------------------------------
# Pure-JAX reference (verification only), using PyTorch Conv2d-layout weights.
# ----------------------------------------------------------------------------
def _ref_forward(x_nchw, proj_w, proj_b, out_w, out_b, inner):
    y = jnp.einsum("nchw,oc->nohw", x_nchw, proj_w[:, :, 0, 0]) + proj_b[None, :, None, None]
    h, g = y[:, :inner], y[:, inner:]
    act = h * _gelu_tanh(g)
    return jnp.einsum("nchw,oc->nohw", act, out_w[:, :, 0, 0]) + out_b[None, :, None, None]


if __name__ == "__main__":
    N, dim, H, W = 2, 32, 16, 16
    mult = 4
    inner = dim * mult          # 128
    dim_out = dim               # 32 (dim_out=None in the module -> dim)

    key = jax.random.PRNGKey(0)
    k = jax.random.split(key, 5)

    # Parameters in PyTorch Conv2d(1x1) layout.
    proj_w = 0.1 * jax.random.normal(k[0], (2 * inner, dim, 1, 1), jnp.float32)
    proj_b = 0.1 * jax.random.normal(k[1], (2 * inner,), jnp.float32)
    out_w = 0.1 * jax.random.normal(k[2], (dim_out, inner, 1, 1), jnp.float32)
    out_b = 0.1 * jax.random.normal(k[3], (dim_out,), jnp.float32)

    params = {
        "wh": proj_w[:inner, :, 0, 0].T,   # (dim, inner)  value half
        "wg": proj_w[inner:, :, 0, 0].T,   # (dim, inner)  gate half
        "bh": proj_b[:inner],
        "bg": proj_b[inner:],
        "w2": out_w[:, :, 0, 0].T,         # (inner, dim_out)
        "b2": out_b,
    }

    x = jax.random.normal(k[4], (N, dim, H, W), jnp.float32)

    ref = jax.block_until_ready(_ref_forward(x, proj_w, proj_b, out_w, out_b, inner))

    # f32 MXU path: strict correctness check.
    out_f32 = jax.block_until_ready(
        feed_forward(x, params, compute_dtype=jnp.float32))
    assert out_f32.shape == (N, dim_out, H, W)
    err_f32 = float(jnp.max(jnp.abs(out_f32 - ref)))
    assert err_f32 < 5e-3, err_f32

    # bf16-operand MXU path (default / production): tolerance reflects bf16 rounding.
    out_bf16 = jax.block_until_ready(
        feed_forward(x, params, compute_dtype=jnp.bfloat16))
    assert out_bf16.shape == (N, dim_out, H, W)
    err_bf16 = float(jnp.max(jnp.abs(out_bf16 - ref)))
    assert err_bf16 < 5e-2, err_bf16

    print("KERNEL_OK")
</pallas_src>

<mosaic_0001>
module attributes {stable_mosaic.version = 11 : i64} {
  func.func @_ffn_geglu_kernel(%arg0: i32, %arg1: i32, %arg2: i32, %arg3: memref<1x32x256xf32, #tpu.memory_space<vmem>>, %arg4: memref<2x128x32xf32, #tpu.memory_space<vmem>>, %arg5: memref<32x128xf32, #tpu.memory_space<vmem>>, %arg6: memref<2x128x1xf32, #tpu.memory_space<vmem>>, %arg7: memref<32x1xf32, #tpu.memory_space<vmem>>, %arg8: memref<1x32x256xf32, #tpu.memory_space<vmem>>, %arg9: memref<32x256xf32, #tpu.memory_space<vmem>>) attributes {dimension_semantics = [#tpu.dimension_semantics<parallel>, #tpu.dimension_semantics<parallel>, #tpu.dimension_semantics<arbitrary>], iteration_bounds = array<i64: 2, 1, 1>, scalar_prefetch = 0 : i64, scratch_operands = 1 : i64, tpu.core_type = #tpu.core_type<tc>, window_params = [{transform_indices = @transform_0, window_bounds = array<i64: 1, 32, 256>}, {transform_indices = @transform_1, window_bounds = array<i64: 2, 128, 32>}, {transform_indices = @transform_2, window_bounds = array<i64: 32, 128>}, {transform_indices = @transform_3, window_bounds = array<i64: 2, 128, 1>}, {pipeline_mode = #tpu.pipeline_mode<synchronous>, transform_indices = @transform_4, window_bounds = array<i64: 32, 1>}, {transform_indices = @transform_5, window_bounds = array<i64: 1, 32, 256>}]} {
    %c0_i32 = arith.constant 0 : i32
    %0 = arith.cmpi eq, %arg2, %c0_i32 : i32
    %1 = arith.extui %0 : i1 to i32
    %c0_i32_0 = arith.constant 0 : i32
    %2 = arith.cmpi ne, %1, %c0_i32_0 : i32
    scf.if %2 {
      %cst_28 = arith.constant 0.000000e+00 : f32
      %41 = vector.broadcast %cst_28 : f32 to vector<32x256xf32>
      %c0_29 = arith.constant 0 : index
      %c0_30 = arith.constant 0 : index
      %42 = vector.load %arg9[%c0_29, %c0_30] : memref<32x256xf32, #tpu.memory_space<vmem>>, vector<32x256xf32>
      tpu.vector_store %arg9[%c0_29, %c0_30], %41 {strides = array<i32>} : memref<32x256xf32, #tpu.memory_space<vmem>>, vector<32x256xf32>,
    } else {
    }
    %c0 = arith.constant 0 : index
    %c0_1 = arith.constant 0 : index
    %c0_2 = arith.constant 0 : index
    %3 = vector.load %arg3[%c0, %c0_1, %c0_2] : memref<1x32x256xf32, #tpu.memory_space<vmem>>, vector<1x32x256xf32>
    %4 = vector.shape_cast %3 : vector<1x32x256xf32> to vector<32x256xf32>
    %c0_3 = arith.constant 0 : index
    %c0_4 = arith.constant 0 : index
    %c0_5 = arith.constant 0 : index
    %5 = vector.load %arg4[%c0_3, %c0_4, %c0_5] : memref<2x128x32xf32, #tpu.memory_space<vmem>>, vector<1x128x32xf32>
    %6 = vector.shape_cast %5 : vector<1x128x32xf32> to vector<128x32xf32>
    %cst = arith.constant dense<0.000000e+00> : vector<128x256xf32>
    %7 = tpu.matmul %6, %4, %cst {dimension_numbers = #tpu.dot_dimension_numbers<[1], [0], [0], [1], [0, 0, 1, 1], [], []>} : vector<128x32xf32>, vector<32x256xf32>, vector<128x256xf32> -> vector<128x256xf32>
    %c0_6 = arith.constant 0 : index
    %c0_7 = arith.constant 0 : index
    %c0_8 = arith.constant 0 : index
    %8 = vector.load %arg6[%c0_6, %c0_7, %c0_8] : memref<2x128x1xf32, #tpu.memory_space<vmem>>, vector<1x128x1xf32>
    %9 = vector.shape_cast %8 : vector<1x128x1xf32> to vector<128x1xf32>
    %10 = vector.broadcast %9 : vector<128x1xf32> to vector<128x256xf32>
    %11 = arith.addf %7, %10 : vector<128x256xf32>
    %c1 = arith.constant 1 : index
    %c0_9 = arith.constant 0 : index
    %c0_10 = arith.constant 0 : index
    %12 = vector.load %arg4[%c1, %c0_9, %c0_10] : memref<2x128x32xf32, #tpu.memory_space<vmem>>, vector<1x128x32xf32>
    %13 = vector.shape_cast %12 : vector<1x128x32xf32> to vector<128x32xf32>
    %cst_11 = arith.constant dense<0.000000e+00> : vector<128x256xf32>
    %14 = tpu.matmul %13, %4, %cst_11 {dimension_numbers = #tpu.dot_dimension_numbers<[1], [0], [0], [1], [0, 0, 1, 1], [], []>} : vector<128x32xf32>, vector<32x256xf32>, vector<128x256xf32> -> vector<128x256xf32>
    %c1_12 = arith.constant 1 : index
    %c0_13 = arith.constant 0 : index
    %c0_14 = arith.constant 0 : index
    %15 = vector.load %arg6[%c1_12, %c0_13, %c0_14] : memref<2x128x1xf32, #tpu.memory_space<vmem>>, vector<1x128x1xf32>
    %16 = vector.shape_cast %15 : vector<1x128x1xf32> to vector<128x1xf32>
    %17 = vector.broadcast %16 : vector<128x1xf32> to vector<128x256xf32>
    %18 = arith.addf %14, %17 : vector<128x256xf32>
    %cst_15 = arith.constant 5.000000e-01 : f32
    %19 = vector.broadcast %cst_15 : f32 to vector<128x256xf32>
    %20 = arith.mulf %19, %18 : vector<128x256xf32>
    %cst_16 = arith.constant 4.471500e-02 : f32
    %21 = vector.broadcast %cst_16 : f32 to vector<128x256xf32>
    %22 = arith.mulf %21, %18 : vector<128x256xf32>
    %23 = arith.mulf %22, %18 : vector<128x256xf32>
    %24 = arith.mulf %23, %18 : vector<128x256xf32>
    %25 = arith.addf %18, %24 : vector<128x256xf32>
    %cst_17 = arith.constant 0.797884583 : f32
    %26 = vector.broadcast %cst_17 : f32 to vector<128x256xf32>
    %27 = arith.mulf %26, %25 : vector<128x256xf32>
    %28 = math.tanh %27 : vector<128x256xf32>
    %cst_18 = arith.constant 1.000000e+00 : f32
    %29 = vector.broadcast %cst_18 : f32 to vector<128x256xf32>
    %30 = arith.addf %29, %28 : vector<128x256xf32>
    %31 = arith.mulf %20, %30 : vector<128x256xf32>
    %32 = arith.mulf %11, %31 : vector<128x256xf32>
    %c0_19 = arith.constant 0 : index
    %c0_20 = arith.constant 0 : index
    %33 = vector.load %arg9[%c0_19, %c0_20] : memref<32x256xf32, #tpu.memory_space<vmem>>, vector<32x256xf32>
    %c0_21 = arith.constant 0 : index
    %c0_22 = arith.constant 0 : index
    %34 = vector.load %arg5[%c0_21, %c0_22] : memref<32x128xf32, #tpu.memory_space<vmem>>, vector<32x128xf32>
    %cst_23 = arith.constant dense<0.000000e+00> : vector<32x256xf32>
    %35 = tpu.matmul %34, %32, %cst_23 {dimension_numbers = #tpu.dot_dimension_numbers<[1], [0], [0], [1], [0, 0, 1, 1], [], []>} : vector<32x128xf32>, vector<128x256xf32>, vector<32x256xf32> -> vector<32x256xf32>
    %36 = arith.addf %33, %35 : vector<32x256xf32>
    %c0_24 = arith.constant 0 : index
    %c0_25 = arith.constant 0 : index
    %37 = vector.load %arg9[%c0_24, %c0_25] : memref<32x256xf32, #tpu.memory_space<vmem>>, vector<32x256xf32>
    tpu.vector_store %arg9[%c0_24, %c0_25], %36 {strides = array<i32>} : memref<32x256xf32, #tpu.memory_space<vmem>>, vector<32x256xf32>,
    %c0_i32_26 = arith.constant 0 : i32
    %38 = arith.cmpi eq, %arg2, %c0_i32_26 : i32
    %39 = arith.extui %38 : i1 to i32
    %c0_i32_27 = arith.constant 0 : i32
    %40 = arith.cmpi ne, %39, %c0_i32_27 : i32
    scf.if %40 {
      %c0_28 = arith.constant 0 : index
      %c0_29 = arith.constant 0 : index
      %41 = vector.load %arg9[%c0_28, %c0_29] : memref<32x256xf32, #tpu.memory_space<vmem>>, vector<32x256xf32>
      %c0_30 = arith.constant 0 : index
      %c0_31 = arith.constant 0 : index
      %42 = vector.load %arg7[%c0_30, %c0_31] : memref<32x1xf32, #tpu.memory_space<vmem>>, vector<32x1xf32>
      %43 = vector.broadcast %42 : vector<32x1xf32> to vector<32x256xf32>
      %44 = arith.addf %41, %43 : vector<32x256xf32>
      %c0_32 = arith.constant 0 : index
      %c0_33 = arith.constant 0 : index
      %c0_34 = arith.constant 0 : index
      %45 = vector.load %arg8[%c0_32, %c0_33, %c0_34] : memref<1x32x256xf32, #tpu.memory_space<vmem>>, vector<1x32x256xf32>
      %46 = vector.shape_cast %45 : vector<1x32x256xf32> to vector<32x256xf32>
      %47 = vector.shape_cast %44 : vector<32x256xf32> to vector<1x32x256xf32>
      tpu.vector_store %arg8[%c0_32, %c0_33, %c0_34], %47 {strides = array<i32>} : memref<1x32x256xf32, #tpu.memory_space<vmem>>, vector<1x32x256xf32>,
    } else {
    }
    return
  }
  func.func @transform_0(%arg0: i32, %arg1: i32, %arg2: i32) -> (i32, i32, i32) {
    %c0_i32 = arith.constant 0 : i32
    %c0_i32_0 = arith.constant 0 : i32
    return %arg0, %c0_i32, %arg1 : i32, i32, i32
  }
  func.func @transform_1(%arg0: i32, %arg1: i32, %arg2: i32) -> (i32, i32, i32) {
    %c0_i32 = arith.constant 0 : i32
    %c0_i32_0 = arith.constant 0 : i32
    %c0_i32_1 = arith.constant 0 : i32
    return %c0_i32, %arg2, %c0_i32_0 : i32, i32, i32
  }
  func.func @transform_2(%arg0: i32, %arg1: i32, %arg2: i32) -> (i32, i32) {
    %c0_i32 = arith.constant 0 : i32
    %c0_i32_0 = arith.constant 0 : i32
    return %c0_i32, %arg2 : i32, i32
  }
  func.func @transform_3(%arg0: i32, %arg1: i32, %arg2: i32) -> (i32, i32, i32) {
    %c0_i32 = arith.constant 0 : i32
    %c0_i32_0 = arith.constant 0 : i32
    %c0_i32_1 = arith.constant 0 : i32
    return %c0_i32, %arg2, %c0_i32_0 : i32, i32, i32
  }
  func.func @transform_4(%arg0: i32, %arg1: i32, %arg2: i32) -> (i32, i32) {
    %c0_i32 = arith.constant 0 : i32
    %c0_i32_0 = arith.constant 0 : i32
    %c0_i32_1 = arith.constant 0 : i32
    return %c0_i32, %c0_i32_0 : i32, i32
  }
  func.func @transform_5(%arg0: i32, %arg1: i32, %arg2: i32) -> (i32, i32, i32) {
    %c0_i32 = arith.constant 0 : i32
    %c0_i32_0 = arith.constant 0 : i32
    return %arg0, %c0_i32, %arg1 : i32, i32, i32
  }
}

</mosaic_0001>

<llo_original>
// kernel: tpu_custom_call.1
$region0: #{tpu_custom_call.1}
  #allocation0 [shape = 'u32[]', space=smem, size = 0x4, offset = 0x4, fixed_abs, tag = 'smem constant byte address 0x4 - core index']
  #allocation1 [shape = 'u32[144,128]{1,0:T(1,128)}', space=vmem, size = 0x12000, scoped, tag = 'internal scratch']
  #allocation2 [shape = 'f32[32,256]{1,0:T(8,128)}', space=vmem, size = 0x8000, scoped, tag = 'scratch operand']
  %s0 = inlined_call_operand.vmem [shape: f32[2,32,256], index: 0, kind: input, shape index: {}]
  %s1 = inlined_call_operand.vmem [shape: f32[2,128,32], index: 1, kind: input, shape index: {}]
  %s2 = inlined_call_operand.vmem [shape: f32[32,128], index: 2, kind: input, shape index: {}]
  %s3 = inlined_call_operand.vmem [shape: f32[2,128,1], index: 3, kind: input, shape index: {}]
  %s4 = inlined_call_operand.vmem [shape: f32[32,1], index: 4, kind: input, shape index: {}]
  %s5 = inlined_call_operand.hbm [shape: f32[2,32,256], index: 5, kind: output, shape index: {}]
  %s6 = sld [smem:[#allocation0]]
  $region61: #{tpu_custom_call.1} parent=0
    _
  %s8 = ssub.s32 1, %s6
  %s9 = scalar_select 0, %s8, %s6
  $region1: #{tpu_custom_call.1} parent=0
    #allocation3 [shape = 'u8[65536]{0}', space=vmem, size = 0x10000, scoped, tag = 'output window, operand 0']
    #allocation4 [shape = 's32[2]{0}', space=sflag, size = 0x8, scoped, tag = 'scoped memory for tpu_custom_call.1']
    %10 = vsyncpa [#allocation4], 0
    %s11 = scalar_lea.sflag [#allocation4], 1
    %12 = vsyncpa %s11, 0
    loop: start=0, step=1, limit=4
    $region2: #{tpu_custom_call.1} parent=1 // loop_pre_header
      _
    $region3: #{tpu_custom_call.1} parent=1 // loop_header
      %s14 = sphi 0, %s18
      %p15 = scmp.ge.s32.totalorder %s14, 4
      %s21 = sphi 0, %s40
      %s22 = sphi 0, %s36
      %s23 = sphi 0, %s32
      %s24 = sphi 0, %s21
      %s25 = sphi 0, %s22
      %s26 = sphi 0, %s23
      %s27 = sphi 0, %s24
      %s28 = sphi 0, %s25
      %s29 = sphi 0, %s26
      %s45 = sphi 0, %s47
      %s48 = sphi 0, %s45
      %s49 = sphi 0, %s48
      %s65 = sphi 0, %s49
      %s71 = sphi 0, %s73
      %s74 = sphi 0, %s71
      %s75 = sphi 0, %s74
      %s91 = sphi 0, %s75
      %s97 = sphi 0, %s99
      %s100 = sphi 0, %s97
      %s101 = sphi 0, %s100
      %s117 = sphi 0, %s101
      %s123 = sphi 0, %s125
      %s126 = sphi 0, %s123
      %s127 = sphi 0, %s126
      %s143 = sphi 0, %s127
      %s147 = sphi 0, %s147
      %s149 = sphi 0, %s147
      %s150 = sphi 0, %s149
      %s164 = sphi 0, %s150
      %s172 = sphi 0, %s174
      %s175 = sphi 0, %s172
      %s176 = sphi 0, %s175
      %s192 = sphi 0, %s176
    $region4: #{tpu_custom_call.1} parent=1 // loop_header_branch
      %17 = sbr.rel (%p15) target = $region8
    $region5: #{tpu_custom_call.1} parent=1 // loop_body
      %s19 = ssub.s32 %s14, 1
      %s20 = ssub.s32 %s14, 2
      %s30 = sadd.s32 1, %s23
      %p31 = scmp.ge.s32.totalorder %s30, 1
      %s32 = scalar_select %p31, 0, %s30
      %s33 = sadd.s32 1, %s22
      %s34 = scalar_select %p31, %s33, %s22
      %p35 = scmp.ge.s32.totalorder %s34, 1
      %s36 = scalar_select %p35, 0, %s34
      %s37 = sadd.s32 1, %s21
      %s38 = scalar_select %p35, %s37, %s21
      %p39 = scmp.ge.s32.totalorder %s38, 2
      %s40 = scalar_select %p39, 0, %s38
      %s41 = ssub.s32 %s21, %s40
      %s42 = ssub.s32 %s22, %s36
      %s43 = sor.u32 %s41, %s42
      %p44 = scmp.eq.s32.totalorder %s43, 0
      %s46 = sadd.s32 %s45, 1
      %s47 = scalar_select %p44, %s45, %s46
      %p50 = pneg %p44
      %p51 = scmp.eq.s32.totalorder %s14, 1
      %p52 = por %p50, %p51
      %p53 = scmp.ne.s32.totalorder %s45, %s48
      %p54 = scmp.eq.s32.totalorder %s14, 0
      %p55 = por %p53, %p54
      %p56 = scmp.ne.s32.totalorder %s45, %s48
      %p57 = scmp.eq.s32.totalorder %s19, 1
      %p58 = por %p56, %p57
      %p59 = scmp.ne.s32.totalorder %s48, %s49
      %p60 = scmp.eq.s32.totalorder %s19, 0
      %p61 = por %p59, %p60
      %p62 = scmp.ne.s32.totalorder %s48, %s49
      %p63 = scmp.eq.s32.totalorder %s20, 1
      %p64 = por %p62, %p63
      %p66 = scmp.ne.s32.totalorder %s49, %s65
      %p67 = scmp.eq.s32.totalorder %s20, 0
      %p68 = por %p66, %p67
      %s69 = ssub.s32 %s23, %s32
      %p70 = scmp.eq.s32.totalorder %s69, 0
      %s72 = sadd.s32 %s71, 1
      %s73 = scalar_select %p70, %s71, %s72
      %p76 = pneg %p70
      %p77 = scmp.eq.s32.totalorder %s14, 1
      %p78 = por %p76, %p77
      %p79 = scmp.ne.s32.totalorder %s71, %s74
      %p80 = scmp.eq.s32.totalorder %s14, 0
      %p81 = por %p79, %p80
      %p82 = scmp.ne.s32.totalorder %s71, %s74
      %p83 = scmp.eq.s32.totalorder %s19, 1
      %p84 = por %p82, %p83
      %p85 = scmp.ne.s32.totalorder %s74, %s75
      %p86 = scmp.eq.s32.totalorder %s19, 0
      %p87 = por %p85, %p86
      %p88 = scmp.ne.s32.totalorder %s74, %s75
      %p89 = scmp.eq.s32.totalorder %s20, 1
      %p90 = por %p88, %p89
      %p92 = scmp.ne.s32.totalorder %s75, %s91
      %p93 = scmp.eq.s32.totalorder %s20, 0
      %p94 = por %p92, %p93
      %s95 = ssub.s32 %s23, %s32
      %p96 = scmp.eq.s32.totalorder %s95, 0
      %s98 = sadd.s32 %s97, 1
      %s99 = scalar_select %p96, %s97, %s98
      %p102 = pneg %p96
      %p103 = scmp.eq.s32.totalorder %s14, 1
      %p104 = por %p102, %p103
      %p105 = scmp.ne.s32.totalorder %s97, %s100
      %p106 = scmp.eq.s32.totalorder %s14, 0
      %p107 = por %p105, %p106
      %p108 = scmp.ne.s32.totalorder %s97, %s100
      %p109 = scmp.eq.s32.totalorder %s19, 1
      %p110 = por %p108, %p109
      %p111 = scmp.ne.s32.totalorder %s100, %s101
      %p112 = scmp.eq.s32.totalorder %s19, 0
      %p113 = por %p111, %p112
      %p114 = scmp.ne.s32.totalorder %s100, %s101
      %p115 = scmp.eq.s32.totalorder %s20, 1
      %p116 = por %p114, %p115
      %p118 = scmp.ne.s32.totalorder %s101, %s117
      %p119 = scmp.eq.s32.totalorder %s20, 0
      %p120 = por %p118, %p119
      %s121 = ssub.s32 %s23, %s32
      %p122 = scmp.eq.s32.totalorder %s121, 0
      %s124 = sadd.s32 %s123, 1
      %s125 = scalar_select %p122, %s123, %s124
      %p128 = pneg %p122
      %p129 = scmp.eq.s32.totalorder %s14, 1
      %p130 = por %p128, %p129
      %p131 = scmp.ne.s32.totalorder %s123, %s126
      %p132 = scmp.eq.s32.totalorder %s14, 0
      %p133 = por %p131, %p132
      %p134 = scmp.ne.s32.totalorder %s123, %s126
      %p135 = scmp.eq.s32.totalorder %s19, 1
      %p136 = por %p134, %p135
      %p137 = scmp.ne.s32.totalorder %s126, %s127
      %p138 = scmp.eq.s32.totalorder %s19, 0
      %p139 = por %p137, %p138
      %p140 = scmp.ne.s32.totalorder %s126, %s127
      %p141 = scmp.eq.s32.totalorder %s20, 1
      %p142 = por %p140, %p141
      %p144 = scmp.ne.s32.totalorder %s127, %s143
      %p145 = scmp.eq.s32.totalorder %s20, 0
      %p146 = por %p144, %p145
      %s148 = sadd.s32 %s147, 1
      %p151 = scmp.eq.s32.totalorder %s14, 1
      %p152 = scmp.ne.s32.totalorder %s147, %s149
      %p153 = scmp.eq.s32.totalorder %s14, 0
      %p154 = por %p152, %p153
      %p155 = scmp.ne.s32.totalorder %s147, %s149
      %p156 = scmp.eq.s32.totalorder %s19, 1
      %p157 = por %p155, %p156
      %p158 = scmp.ne.s32.totalorder %s149, %s150
      %p159 = scmp.eq.s32.totalorder %s19, 0
      %p160 = por %p158, %p159
      %p161 = scmp.ne.s32.totalorder %s149, %s150
      %p162 = scmp.eq.s32.totalorder %s20, 1
      %p163 = por %p161, %p162
      %p165 = scmp.ne.s32.totalorder %s150, %s164
      %p166 = scmp.eq.s32.totalorder %s20, 0
      %p167 = por %p165, %p166
      %s168 = ssub.s32 %s21, %s40
      %s169 = ssub.s32 %s22, %s36
      %s170 = sor.u32 %s168, %s169
      %p171 = scmp.eq.s32.totalorder %s170, 0
      %s173 = sadd.s32 %s172, 1
      %s174 = scalar_select %p171, %s172, %s173
      %p177 = pneg %p171
      %p178 = scmp.eq.s32.totalorder %s14, 1
      %p179 = por %p177, %p178
      %p180 = scmp.ne.s32.totalorder %s172, %s175
      %p181 = scmp.eq.s32.totalorder %s14, 0
      %p182 = por %p180, %p181
      %p183 = scmp.ne.s32.totalorder %s172, %s175
      %p184 = scmp.eq.s32.totalorder %s19, 1
      %p185 = por %p183, %p184
      %p186 = scmp.ne.s32.totalorder %s175, %s176
      %p187 = scmp.eq.s32.totalorder %s19, 0
      %p188 = por %p186, %p187
      %p189 = scmp.ne.s32.totalorder %s175, %s176
      %p190 = scmp.eq.s32.totalorder %s20, 1
      %p191 = por %p189, %p190
      %p193 = scmp.ne.s32.totalorder %s176, %s192
      %p194 = scmp.eq.s32.totalorder %s20, 0
      %p195 = por %p193, %p194
      %p196 = scmp.le.s32.totalorder 1, %s14
      %p197 = scmp.lt.s32.totalorder %s14, 3
      %p198 = pnand %p196, %p197
      %p199 = pneg %p198
      // Predicated region
      $region9: #{tpu_custom_call.1} parent=5 // pred_check
        _
      $region10: #{tpu_custom_call.1} parent=5 // pred_check_branch
        %201 = sbr.rel (%p198) target = $region12
      $region11: #{tpu_custom_call.1} parent=5 // pred_region
        %s202 = ssub.s32 %s14, 1
        // Predicated region
        $region13: #{tpu_custom_call.1} parent=11 // pred_check
          %p203 = pneg %p87
        $region14: #{tpu_custom_call.1} parent=11 // pred_check_branch
          %205 = sbr.rel (%p203) target = $region16
        $region15: #{tpu_custom_call.1} parent=11 // pred_region
          %s206 = smul.u32 16, %s26
          %p207 = scmp.lt.s32.totalorder %s206, 15
          %s208 = scalar_select %p207, %s206, 15
          %s209 = smul.addr %s208, 8
          %s210 = scalar_lea.vmem %s1, %s209
          %s211 = smul.u32 16, %s26
        $region16: #{tpu_custom_call.1} parent=11 // pred_fallthru
          _
        // Predicated region
        $region17: #{tpu_custom_call.1} parent=11 // pred_check
          %p212 = pneg %p113
        $region18: #{tpu_custom_call.1} parent=11 // pred_check_branch
          %214 = sbr.rel (%p212) target = $region20
        $region19: #{tpu_custom_call.1} parent=11 // pred_region
          %p215 = scmp.lt.s32.totalorder %s26, 0
          %s216 = scalar_select %p215, %s26, 0
          %s217 = smul.addr %s216, 8
          %s218 = scalar_lea.vmem %s2, %s217
        $region20: #{tpu_custom_call.1} parent=11 // pred_fallthru
          _
        // Predicated region
        $region21: #{tpu_custom_call.1} parent=11 // pred_check
          %p219 = pneg %p139
        $region22: #{tpu_custom_call.1} parent=11 // pred_check_branch
          %221 = sbr.rel (%p219) target = $region24
        $region23: #{tpu_custom_call.1} parent=11 // pred_region
          %s222 = smul.u32 16, %s26
          %p223 = scmp.lt.s32.totalorder %s222, 15
          %s224 = scalar_select %p223, %s222, 15
          %s225 = smul.addr %s224, 8
          %s226 = scalar_lea.vmem %s3, %s225
          %s227 = smul.u32 16, %s26
        $region24: #{tpu_custom_call.1} parent=11 // pred_fallthru
          _
        // Predicated region
        $region25: #{tpu_custom_call.1} parent=11 // pred_check
          %p228 = pneg %p160
        $region26: #{tpu_custom_call.1} parent=11 // pred_check_branch
          %230 = sbr.rel (%p228) target = $region28
        $region27: #{tpu_custom_call.1} parent=11 // pred_region
          _
        $region28: #{tpu_custom_call.1} parent=11 // pred_fallthru
          _
      $region12: #{tpu_custom_call.1} parent=5 // pred_fallthru
        _
      %p231 = scmp.lt.s32.totalorder %s14, 2
      // Predicated region
      $region29: #{tpu_custom_call.1} parent=5 // pred_check
        %p232 = pneg %p231
      $region30: #{tpu_custom_call.1} parent=5 // pred_check_branch
        %234 = sbr.rel (%p232) target = $region32
      $region31: #{tpu_custom_call.1} parent=5 // pred_region
        // Predicated region
        $region33: #{tpu_custom_call.1} parent=31 // pred_check
          %p235 = pneg %p55
        $region34: #{tpu_custom_call.1} parent=31 // pred_check_branch
          %237 = sbr.rel (%p235) target = $region36
        $region35: #{tpu_custom_call.1} parent=31 // pred_region
          %s238 = smul.u32 2, %s22
          %p239 = scmp.lt.s32.totalorder %s21, 1
          %s240 = scalar_select %p239, %s21, 1
          %p241 = scmp.lt.s32.totalorder %s238, 1
          %s242 = scalar_select %p241, %s238, 1
          %s243 = smul.addr %s240, 8
          %s244 = sadd.s32 %s242, %s243
          %s245 = smul.addr %s244, 8
          %s246 = scalar_lea.vmem %s0, %s245
          %s247 = smul.u32 2, %s22
        $region36: #{tpu_custom_call.1} parent=31 // pred_fallthru
          _
      $region32: #{tpu_custom_call.1} parent=5 // pred_fallthru
        _
      %p248 = scmp.le.s32.totalorder 1, %s14
      %p249 = scmp.lt.s32.totalorder %s14, 3
      %p250 = pnand %p248, %p249
      %p251 = pneg %p250
      // Predicated region
      $region37: #{tpu_custom_call.1} parent=5 // pred_check
        _
      $region38: #{tpu_custom_call.1} parent=5 // pred_check_branch
        %253 = sbr.rel (%p250) target = $region40
      $region39: #{tpu_custom_call.1} parent=5 // pred_region
        %s254 = ssub.s32 %s14, 1
        %s255 = smul.u32 2, %s25
        %p256 = scmp.lt.s32.totalorder %s24, 1
        %s257 = scalar_select %p256, %s24, 1
        %p258 = scmp.lt.s32.totalorder %s255, 1
        %s259 = scalar_select %p258, %s255, 1
        %s260 = smul.addr %s257, 8
        %s261 = sadd.s32 %s259, %s260
        %s262 = smul.addr %s261, 8
        %s263 = scalar_lea.vmem %s0, %s262
        %p264 = pneg %p61
        %p265 = pneg %p58
        %s266 = smul.u32 16, %s26
        %p267 = scmp.lt.s32.totalorder %s266, 15
        %s268 = scalar_select %p267, %s266, 15
        %s269 = smul.addr %s268, 8
        %s270 = scalar_lea.vmem %s1, %s269
        %p271 = pneg %p87
        %p272 = pneg %p84
        %p273 = scmp.lt.s32.totalorder %s26, 0
        %s274 = scalar_select %p273, %s26, 0
        %s275 = smul.addr %s274, 8
        %s276 = scalar_lea.vmem %s2, %s275
        %p277 = pneg %p113
        %p278 = pneg %p110
        %s279 = smul.u32 16, %s26
        %p280 = scmp.lt.s32.totalorder %s279, 15
        %s281 = scalar_select %p280, %s279, 15
        %s282 = smul.addr %s281, 8
        %s283 = scalar_lea.vmem %s3, %s282
        %p284 = pneg %p139
        %p285 = pneg %p136
        %p286 = pneg %p160
        %p287 = pneg %p157
        %p288 = pneg %p188
        %p289 = pneg %p185
        %s290 = sand.u32 %s175, 1
        %s291 = scalar_lea.sflag [#allocation4], %s290
        %s292 = sand.u32 %s175, 1
        %s293 = smul.addr %s292, 64
        %s294 = scalar_lea.vmem [#allocation3], %s293
        %s295 = smul.u32 2, %s25
        %p296 = scmp.lt.s32.totalorder %s24, 1
        %s297 = scalar_select %p296, %s24, 1
        %p298 = scmp.lt.s32.totalorder %s295, 1
        %s299 = scalar_select %p298, %s295, 1
        %s300 = smul.addr %s297, 8
        %s301 = sadd.s32 %s299, %s300
        %s302 = smul.addr %s301, 8
        %s303 = scalar_lea.vmem %s0, %s302
        %s304 = smul.u32 2, %s25
        %s305 = smul.u32 16, %s26
        %p306 = scmp.lt.s32.totalorder %s305, 15
        %s307 = scalar_select %p306, %s305, 15
        %s308 = smul.addr %s307, 8
        %s309 = scalar_lea.vmem %s1, %s308
        %s310 = smul.u32 16, %s26
        %p311 = scmp.lt.s32.totalorder %s26, 0
        %s312 = scalar_select %p311, %s26, 0
        %s313 = smul.addr %s312, 8
        %s314 = scalar_lea.vmem %s2, %s313
        %s315 = smul.u32 16, %s26
        %p316 = scmp.lt.s32.totalorder %s315, 15
        %s317 = scalar_select %p316, %s315, 15
        %s318 = smul.addr %s317, 8
        %s319 = scalar_lea.vmem %s3, %s318
        %s320 = smul.u32 16, %s26
        %s321 = smul.u32 2, %s25
        %p322 = scmp.eq.s32.totalorder %s26, 0
        // Predicated region
        $region41: #{tpu_custom_call.1} parent=39 // pred_check
          %p323 = pneg %p322
        $region42: #{tpu_custom_call.1} parent=39 // pred_check_branch
          %325 = sbr.rel (%p323) target = $region44
        $region43: #{tpu_custom_call.1} parent=39 // pred_region
          %326 = vst [vmem:[#allocation2] sm:$0xff] 0.0
          %327 = vst [vmem:[#allocation2 + $0x8] sm:$0xff] 0.0
          %328 = vst [vmem:[#allocation2 + $0x10] sm:$0xff] 0.0
          %329 = vst [vmem:[#allocation2 + $0x18] sm:$0xff] 0.0
          %330 = vst [vmem:[#allocation2 + $0x20] sm:$0xff] 0.0
          %331 = vst [vmem:[#allocation2 + $0x28] sm:$0xff] 0.0
          %332 = vst [vmem:[#allocation2 + $0x30] sm:$0xff] 0.0
          %333 = vst [vmem:[#allocation2 + $0x38] sm:$0xff] 0.0
        $region44: #{tpu_custom_call.1} parent=39 // pred_fallthru
          _
        %v334 = vld [vmem:[%s303] sm:$0xff]
        %v335 = vld [vmem:[%s303 + $0x8] sm:$0xff]
        %v336 = vld [vmem:[%s303 + $0x10] sm:$0xff]
        %v337 = vld [vmem:[%s303 + $0x18] sm:$0xff]
        %v338 = vld [vmem:[%s303 + $0x20] sm:$0xff]
        %v339 = vld [vmem:[%s303 + $0x28] sm:$0xff]
        %v340 = vld [vmem:[%s303 + $0x30] sm:$0xff]
        %v341 = vld [vmem:[%s303 + $0x38] sm:$0xff]
        %v342 = vld [vmem:[%s309] sm:$0xff]
        %v343 = vld [vmem:[%s309 + $0x8] sm:$0xff]
        %v344 = vld [vmem:[%s309 + $0x10] sm:$0xff]
        %v345 = vld [vmem:[%s309 + $0x18] sm:$0xff]
        %v346 = vld [vmem:[%s309 + $0x20] sm:$0xff]
        %v347 = vld [vmem:[%s309 + $0x28] sm:$0xff]
        %v348 = vld [vmem:[%s309 + $0x30] sm:$0xff]
        %v349 = vld [vmem:[%s309 + $0x38] sm:$0xff]
        %v350 = vld [vmem:[%s309 + $0x40] sm:$0xff]
        %v351 = vld [vmem:[%s309 + $0x48] sm:$0xff]
        %v352 = vld [vmem:[%s309 + $0x50] sm:$0xff]
        %v353 = vld [vmem:[%s309 + $0x58] sm:$0xff]
        %v354 = vld [vmem:[%s309 + $0x60] sm:$0xff]
        %v355 = vld [vmem:[%s309 + $0x68] sm:$0xff]
        %v356 = vld [vmem:[%s309 + $0x70] sm:$0xff]
        %v357 = vld [vmem:[%s309 + $0x78] sm:$0xff]
        %v358 = vld [vmem:[%s319] sm:$0xff]
        %v359 = vld [vmem:[%s319 + $0x8] sm:$0xff]
        %v360 = vld [vmem:[%s319 + $0x10] sm:$0xff]
        %v361 = vld [vmem:[%s319 + $0x18] sm:$0xff]
        %v362 = vld [vmem:[%s319 + $0x20] sm:$0xff]
        %v363 = vld [vmem:[%s319 + $0x28] sm:$0xff]
        %v364 = vld [vmem:[%s319 + $0x30] sm:$0xff]
        %v365 = vld [vmem:[%s319 + $0x38] sm:$0xff]
        %v366 = vld [vmem:[%s319 + $0x40] sm:$0xff]
        %v367 = vld [vmem:[%s319 + $0x48] sm:$0xff]
        %v368 = vld [vmem:[%s319 + $0x50] sm:$0xff]
        %v369 = vld [vmem:[%s319 + $0x58] sm:$0xff]
        %v370 = vld [vmem:[%s319 + $0x60] sm:$0xff]
        %v371 = vld [vmem:[%s319 + $0x68] sm:$0xff]
        %v372 = vld [vmem:[%s319 + $0x70] sm:$0xff]
        %v373 = vld [vmem:[%s319 + $0x78] sm:$0xff]
        %375 = vset.pattern.permute.xlu0 0
        %376 = vperm.xlu0 %375, %v358
        %v377 = vpop.permute.xlu0 %376
        %380 = vset.pattern.permute.xlu0 0
        %381 = vperm.xlu0 %380, %v359
        %v382 = vpop.permute.xlu0 %381
        %385 = vset.pattern.permute.xlu0 0
        %386 = vperm.xlu0 %385, %v360
        %v387 = vpop.permute.xlu0 %386
        %390 = vset.pattern.permute.xlu0 0
        %391 = vperm.xlu0 %390, %v361
        %v392 = vpop.permute.xlu0 %391
        %395 = vset.pattern.permute.xlu0 0
        %396 = vperm.xlu0 %395, %v362
        %v397 = vpop.permute.xlu0 %396
        %400 = vset.pattern.permute.xlu0 0
        %401 = vperm.xlu0 %400, %v363
        %v402 = vpop.permute.xlu0 %401
        %405 = vset.pattern.permute.xlu0 0
        %406 = vperm.xlu0 %405, %v364
        %v407 = vpop.permute.xlu0 %406
        %410 = vset.pattern.permute.xlu0 0
        %411 = vperm.xlu0 %410, %v365
        %v412 = vpop.permute.xlu0 %411
        %415 = vset.pattern.permute.xlu0 0
        %416 = vperm.xlu0 %415, %v366
        %v417 = vpop.permute.xlu0 %416
        %420 = vset.pattern.permute.xlu0 0
        %421 = vperm.xlu0 %420, %v367
        %v422 = vpop.permute.xlu0 %421
        %425 = vset.pattern.permute.xlu0 0
        %426 = vperm.xlu0 %425, %v368
        %v427 = vpop.permute.xlu0 %426
        %430 = vset.pattern.permute.xlu0 0
        %431 = vperm.xlu0 %430, %v369
        %v432 = vpop.permute.xlu0 %431
        %435 = vset.pattern.permute.xlu0 0
        %436 = vperm.xlu0 %435, %v370
        %v437 = vpop.permute.xlu0 %436
        %440 = vset.pattern.permute.xlu0 0
        %441 = vperm.xlu0 %440, %v371
        %v442 = vpop.permute.xlu0 %441
        %445 = vset.pattern.permute.xlu0 0
        %446 = vperm.xlu0 %445, %v372
        %v447 = vpop.permute.xlu0 %446
        %450 = vset.pattern.permute.xlu0 0
        %451 = vperm.xlu0 %450, %v373
        %v452 = vpop.permute.xlu0 %451
        %vm454 = vcmask 261120
        %v456 = vsel %vm454, %v342, 0
        %v459 = vsel %vm454, %v343, 0
        %v462 = vsel %vm454, %v344, 0
        %v465 = vsel %vm454, %v345, 0
        %v468 = vsel %vm454, %v346, 0
        %v471 = vsel %vm454, %v347, 0
        %v474 = vsel %vm454, %v348, 0
        %v477 = vsel %vm454, %v349, 0
        %v480 = vsel %vm454, %v350, 0
        %v483 = vsel %vm454, %v351, 0
        %v486 = vsel %vm454, %v352, 0
        %v489 = vsel %vm454, %v353, 0
        %v492 = vsel %vm454, %v354, 0
        %v495 = vsel %vm454, %v355, 0
        %v498 = vsel %vm454, %v356, 0
        %v501 = vsel %vm454, %v357, 0
        %503 = vmatprep.subr.mxu0 %v335
        %504 = vmatpush1.msra.mxu0 %v334
        %505 = vmatprep.subr.mxu0 %v337
        %506 = vmatpush1.msra.mxu0 %v336
        %507 = vmatprep.subr.mxu0 %v339
        %508 = vmatpush1.msra.mxu0 %v338
        %509 = vmatprep.subr.mxu0 %v341
        %510 = vmatpush1.msra.mxu0 %v340
        %511 = vmatprep.subr.mxu0 0.0
        %512 = vmatpush1.msra.mxu0 0.0
        %513 = vmatprep.subr.mxu0 0.0
        %514 = vmatpush1.msra.mxu0 0.0
        %515 = vmatprep.subr.mxu0 0.0
        %516 = vmatpush1.msra.mxu0 0.0
        %517 = vmatprep.subr.mxu0 0.0
        %518 = vmatpush1.msra.mxu0 0.0
        %519 = vmatprep.subr.mxu0 0.0
        %520 = vmatpush1.msra.mxu0 0.0
        %521 = vmatprep.subr.mxu0 0.0
        %522 = vmatpush1.msra.mxu0 0.0
        %523 = vmatprep.subr.mxu0 0.0
        %524 = vmatpush1.msra.mxu0 0.0
        %525 = vmatprep.subr.mxu0 0.0
        %526 = vmatpush1.msra.mxu0 0.0
        %527 = vmatprep.subr.mxu0 0.0
        %528 = vmatpush1.msra.mxu0 0.0
        %529 = vmatprep.subr.mxu0 0.0
        %530 = vmatpush1.msra.mxu0 0.0
        %531 = vmatprep.subr.mxu0 0.0
        %532 = vmatpush1.msra.mxu0 0.0
        %533 = vmatprep.subr.mxu0 0.0
        %534 = vmatpush1.msra.mxu0 0.0
        %535 = vmatprep.subr.mxu0 0.0
        %536 = vmatpush1.msra.mxu0 0.0
        %537 = vmatprep.subr.mxu0 0.0
        %538 = vmatpush1.msra.mxu0 0.0
        %539 = vmatprep.subr.mxu0 0.0
        %540 = vmatpush1.msra.mxu0 0.0
        %541 = vmatprep.subr.mxu0 0.0
        %542 = vmatpush1.msra.mxu0 0.0
        %543 = vmatprep.subr.mxu0 0.0
        %544 = vmatpush1.msra.mxu0 0.0
        %545 = vmatprep.subr.mxu0 0.0
        %546 = vmatpush1.msra.mxu0 0.0
        %547 = vmatprep.subr.mxu0 0.0
        %548 = vmatpush1.msra.mxu0 0.0
        %549 = vmatprep.subr.mxu0 0.0
        %550 = vmatpush1.msra.mxu0 0.0
        %551 = vmatprep.subr.mxu0 0.0
        %552 = vmatpush1.msra.mxu0 0.0
        %553 = vmatprep.subr.mxu0 0.0
        %554 = vmatpush1.msra.mxu0 0.0
        %555 = vmatprep.subr.mxu0 0.0
        %556 = vmatpush1.msra.mxu0 0.0
        %557 = vmatprep.subr.mxu0 0.0
        %558 = vmatpush1.msra.mxu0 0.0
        %559 = vmatprep.subr.mxu0 0.0
        %560 = vmatpush1.msra.mxu0 0.0
        %561 = vmatprep.subr.mxu0 0.0
        %562 = vmatpush1.msra.mxu0 0.0
        %563 = vmatprep.subr.mxu0 0.0
        %564 = vmatpush1.msra.mxu0 0.0
        %565 = vmatprep.subr.mxu0 0.0
        %566 = vmatpush1.msra.mxu0 0.0
        %567 = vmatprep.mubr.f32.mxu0 0.0
        %568 = vmatmul.mubr.f32.gmra.mrb[0].mxu0 %v456
        %v569 = vpop.f32.mrb[0].mxu0
        %v570 = vadd.f32 %v377, %v569
        %v571 = vpop.f32.mrb[0].mxu0
        %v572 = vadd.f32 %v377, %v571
        %573 = vmatprep.mubr.f32.mxu0 0.0
        %574 = vmatmul.mubr.f32.gmra.mrb[0].mxu0 %v459
        %v575 = vpop.f32.mrb[0].mxu0
        %v576 = vadd.f32 %v382, %v575
        %v577 = vpop.f32.mrb[0].mxu0
        %v578 = vadd.f32 %v382, %v577
        %579 = vmatprep.mubr.f32.mxu0 0.0
        %580 = vmatmul.mubr.f32.gmra.mrb[0].mxu0 %v462
        %v581 = vpop.f32.mrb[0].mxu0
        %v582 = vadd.f32 %v387, %v581
        %v583 = vpop.f32.mrb[0].mxu0
        %v584 = vadd.f32 %v387, %v583
        %585 = vmatprep.mubr.f32.mxu0 0.0
        %586 = vmatmul.mubr.f32.gmra.mrb[0].mxu0 %v465
        %v587 = vpop.f32.mrb[0].mxu0
        %v588 = vadd.f32 %v392, %v587
        %v589 = vpop.f32.mrb[0].mxu0
        %v590 = vadd.f32 %v392, %v589
        %591 = vmatprep.mubr.f32.mxu0 0.0
        %592 = vmatmul.mubr.f32.gmra.mrb[0].mxu0 %v468
        %v593 = vpop.f32.mrb[0].mxu0
        %v594 = vadd.f32 %v397, %v593
        %v595 = vpop.f32.mrb[0].mxu0
        %v596 = vadd.f32 %v397, %v595
        %597 = vmatprep.mubr.f32.mxu0 0.0
        %598 = vmatmul.mubr.f32.gmra.mrb[0].mxu0 %v471
        %v599 = vpop.f32.mrb[0].mxu0
        %v600 = vadd.f32 %v402, %v599
        %v601 = vpop.f32.mrb[0].mxu0
        %v602 = vadd.f32 %v402, %v601
        %603 = vmatprep.mubr.f32.mxu0 0.0
        %604 = vmatmul.mubr.f32.gmra.mrb[0].mxu0 %v474
        %v605 = vpop.f32.mrb[0].mxu0
        %v606 = vadd.f32 %v407, %v605
        %v607 = vpop.f32.mrb[0].mxu0
        %v608 = vadd.f32 %v407, %v607
        %609 = vmatprep.mubr.f32.mxu0 0.0
        %610 = vmatmul.mubr.f32.gmra.mrb[0].mxu0 %v477
        %v611 = vpop.f32.mrb[0].mxu0
        %v612 = vadd.f32 %v412, %v611
        %v613 = vpop.f32.mrb[0].mxu0
        %v614 = vadd.f32 %v412, %v613
        %615 = vmatprep.mubr.f32.mxu0 0.0
        %616 = vmatmul.mubr.f32.gmra.mrb[0].mxu0 %v480
        %v617 = vpop.f32.mrb[0].mxu0
        %v618 = vadd.f32 %v417, %v617
        %v619 = vpop.f32.mrb[0].mxu0
        %v620 = vadd.f32 %v417, %v619
        %621 = vmatprep.mubr.f32.mxu0 0.0
        %622 = vmatmul.mubr.f32.gmra.mrb[0].mxu0 %v483
        %v623 = vpop.f32.mrb[0].mxu0
        %v624 = vadd.f32 %v422, %v623
        %v625 = vpop.f32.mrb[0].mxu0
        %v626 = vadd.f32 %v422, %v625
        %627 = vmatprep.mubr.f32.mxu0 0.0
        %628 = vmatmul.mubr.f32.gmra.mrb[0].mxu0 %v486
        %v629 = vpop.f32.mrb[0].mxu0
        %v630 = vadd.f32 %v427, %v629
        %v631 = vpop.f32.mrb[0].mxu0
        %v632 = vadd.f32 %v427, %v631
        %633 = vmatprep.mubr.f32.mxu0 0.0
        %634 = vmatmul.mubr.f32.gmra.mrb[0].mxu0 %v489
        %v635 = vpop.f32.mrb[0].mxu0
        %v636 = vadd.f32 %v432, %v635
        %v637 = vpop.f32.mrb[0].mxu0
        %v638 = vadd.f32 %v432, %v637
        %639 = vmatprep.mubr.f32.mxu0 0.0
        %640 = vmatmul.mubr.f32.gmra.mrb[0].mxu0 %v492
        %v641 = vpop.f32.mrb[0].mxu0
        %v642 = vadd.f32 %v437, %v641
        %v643 = vpop.f32.mrb[0].mxu0
        %v644 = vadd.f32 %v437, %v643
        %645 = vmatprep.mubr.f32.mxu0 0.0
        %646 = vmatmul.mubr.f32.gmra.mrb[0].mxu0 %v495
        %v647 = vpop.f32.mrb[0].mxu0
        %v648 = vadd.f32 %v442, %v647
        %v649 = vpop.f32.mrb[0].mxu0
        %v650 = vadd.f32 %v442, %v649
        %651 = vmatprep.mubr.f32.mxu0 0.0
        %652 = vmatmul.mubr.f32.gmra.mrb[0].mxu0 %v498
        %v653 = vpop.f32.mrb[0].mxu0
        %v654 = vadd.f32 %v447, %v653
        %v655 = vpop.f32.mrb[0].mxu0
        %v656 = vadd.f32 %v447, %v655
        %657 = vmatprep.mubr.f32.mxu0 0.0
        %658 = vmatmul.mubr.f32.gmra.mrb[0].mxu0 %v501
        %v659 = vpop.f32.mrb[0].mxu0
        %v660 = vadd.f32 %v452, %v659
        %v661 = vpop.f32.mrb[0].mxu0
        %v662 = vadd.f32 %v452, %v661
        %663 = vdwg.mxu0
        %s664 = scalar_lea.vmem %s309, 128
        %v665 = vld [vmem:[%s664] sm:$0xff]
        %v666 = vld [vmem:[%s664 + $0x8] sm:$0xff]
        %v667 = vld [vmem:[%s664 + $0x10] sm:$0xff]
        %v668 = vld [vmem:[%s664 + $0x18] sm:$0xff]
        %v669 = vld [vmem:[%s664 + $0x20] sm:$0xff]
        %v670 = vld [vmem:[%s664 + $0x28] sm:$0xff]
        %v671 = vld [vmem:[%s664 + $0x30] sm:$0xff]
        %v672 = vld [vmem:[%s664 + $0x38] sm:$0xff]
        %v673 = vld [vmem:[%s664 + $0x40] sm:$0xff]
        %v674 = vld [vmem:[%s664 + $0x48] sm:$0xff]
        %v675 = vld [vmem:[%s664 + $0x50] sm:$0xff]
        %v676 = vld [vmem:[%s664 + $0x58] sm:$0xff]
        %v677 = vld [vmem:[%s664 + $0x60] sm:$0xff]
        %v678 = vld [vmem:[%s664 + $0x68] sm:$0xff]
        %v679 = vld [vmem:[%s664 + $0x70] sm:$0xff]
        %v680 = vld [vmem:[%s664 + $0x78] sm:$0xff]
        %s681 = scalar_lea.vmem %s319, 128
        %v682 = vld [vmem:[%s681] sm:$0xff]
        %v683 = vld [vmem:[%s681 + $0x8] sm:$0xff]
        %v684 = vld [vmem:[%s681 + $0x10] sm:$0xff]
        %v685 = vld [vmem:[%s681 + $0x18] sm:$0xff]
        %v686 = vld [vmem:[%s681 + $0x20] sm:$0xff]
        %v687 = vld [vmem:[%s681 + $0x28] sm:$0xff]
        %v688 = vld [vmem:[%s681 + $0x30] sm:$0xff]
        %v689 = vld [vmem:[%s681 + $0x38] sm:$0xff]
        %v690 = vld [vmem:[%s681 + $0x40] sm:$0xff]
        %v691 = vld [vmem:[%s681 + $0x48] sm:$0xff]
        %v692 = vld [vmem:[%s681 + $0x50] sm:$0xff]
        %v693 = vld [vmem:[%s681 + $0x58] sm:$0xff]
        %v694 = vld [vmem:[%s681 + $0x60] sm:$0xff]
        %v695 = vld [vmem:[%s681 + $0x68] sm:$0xff]
        %v696 = vld [vmem:[%s681 + $0x70] sm:$0xff]
        %v697 = vld [vmem:[%s681 + $0x78] sm:$0xff]
        %699 = vset.pattern.permute.xlu0 0
        %700 = vperm.xlu0 %699, %v682
        %v701 = vpop.permute.xlu0 %700
        %704 = vset.pattern.permute.xlu0 0
        %705 = vperm.xlu0 %704, %v683
        %v706 = vpop.permute.xlu0 %705
        %709 = vset.pattern.permute.xlu0 0
        %710 = vperm.xlu0 %709, %v684
        %v711 = vpop.permute.xlu0 %710
        %714 = vset.pattern.permute.xlu0 0
        %715 = vperm.xlu0 %714, %v685
        %v716 = vpop.permute.xlu0 %715
        %719 = vset.pattern.permute.xlu0 0
        %720 = vperm.xlu0 %719, %v686
        %v721 = vpop.permute.xlu0 %720
        %724 = vset.pattern.permute.xlu0 0
        %725 = vperm.xlu0 %724, %v687
        %v726 = vpop.permute.xlu0 %725
        %729 = vset.pattern.permute.xlu0 0
        %730 = vperm.xlu0 %729, %v688
        %v731 = vpop.permute.xlu0 %730
        %734 = vset.pattern.permute.xlu0 0
        %735 = vperm.xlu0 %734, %v689
        %v736 = vpop.permute.xlu0 %735
        %739 = vset.pattern.permute.xlu0 0
        %740 = vperm.xlu0 %739, %v690
        %v741 = vpop.permute.xlu0 %740
        %744 = vset.pattern.permute.xlu0 0
        %745 = vperm.xlu0 %744, %v691
        %v746 = vpop.permute.xlu0 %745
        %749 = vset.pattern.permute.xlu0 0
        %750 = vperm.xlu0 %749, %v692
        %v751 = vpop.permute.xlu0 %750
        %754 = vset.pattern.permute.xlu0 0
        %755 = vperm.xlu0 %754, %v693
        %v756 = vpop.permute.xlu0 %755
        %759 = vset.pattern.permute.xlu0 0
        %760 = vperm.xlu0 %759, %v694
        %v761 = vpop.permute.xlu0 %760
        %764 = vset.pattern.permute.xlu0 0
        %765 = vperm.xlu0 %764, %v695
        %v766 = vpop.permute.xlu0 %765
        %769 = vset.pattern.permute.xlu0 0
        %770 = vperm.xlu0 %769, %v696
        %v771 = vpop.permute.xlu0 %770
        %774 = vset.pattern.permute.xlu0 0
        %775 = vperm.xlu0 %774, %v697
        %v776 = vpop.permute.xlu0 %775
        %v779 = vsel %vm454, %v665, 0
        %v782 = vsel %vm454, %v666, 0
        %v785 = vsel %vm454, %v667, 0
        %v788 = vsel %vm454, %v668, 0
        %v791 = vsel %vm454, %v669, 0
        %v794 = vsel %vm454, %v670, 0
        %v797 = vsel %vm454, %v671, 0
        %v800 = vsel %vm454, %v672, 0
        %v803 = vsel %vm454, %v673, 0
        %v806 = vsel %vm454, %v674, 0
        %v809 = vsel %vm454, %v675, 0
        %v812 = vsel %vm454, %v676, 0
        %v815 = vsel %vm454, %v677, 0
        %v818 = vsel %vm454, %v678, 0
        %v821 = vsel %vm454, %v679, 0
        %v824 = vsel %vm454, %v680, 0
        %826 = vmatprep.subr.mxu0 %v335
        %827 = vmatpush1.msra.mxu0 %v334
        %828 = vmatprep.subr.mxu0 %v337
        %829 = vmatpush1.msra.mxu0 %v336
        %830 = vmatprep.subr.mxu0 %v339
        %831 = vmatpush1.msra.mxu0 %v338
        %832 = vmatprep.subr.mxu0 %v341
        %833 = vmatpush1.msra.mxu0 %v340
        %834 = vmatprep.subr.mxu0 0.0
        %835 = vmatpush1.msra.mxu0 0.0
        %836 = vmatprep.subr.mxu0 0.0
        %837 = vmatpush1.msra.mxu0 0.0
        %838 = vmatprep.subr.mxu0 0.0
        %839 = vmatpush1.msra.mxu0 0.0
        %840 = vmatprep.subr.mxu0 0.0
        %841 = vmatpush1.msra.mxu0 0.0
        %842 = vmatprep.subr.mxu0 0.0
        %843 = vmatpush1.msra.mxu0 0.0
        %844 = vmatprep.subr.mxu0 0.0
        %845 = vmatpush1.msra.mxu0 0.0
        %846 = vmatprep.subr.mxu0 0.0
        %847 = vmatpush1.msra.mxu0 0.0
        %848 = vmatprep.subr.mxu0 0.0
        %849 = vmatpush1.msra.mxu0 0.0
        %850 = vmatprep.subr.mxu0 0.0
        %851 = vmatpush1.msra.mxu0 0.0
        %852 = vmatprep.subr.mxu0 0.0
        %853 = vmatpush1.msra.mxu0 0.0
        %854 = vmatprep.subr.mxu0 0.0
        %855 = vmatpush1.msra.mxu0 0.0
        %856 = vmatprep.subr.mxu0 0.0
        %857 = vmatpush1.msra.mxu0 0.0
        %858 = vmatprep.subr.mxu0 0.0
        %859 = vmatpush1.msra.mxu0 0.0
        %860 = vmatprep.subr.mxu0 0.0
        %861 = vmatpush1.msra.mxu0 0.0
        %862 = vmatprep.subr.mxu0 0.0
        %863 = vmatpush1.msra.mxu0 0.0
        %864 = vmatprep.subr.mxu0 0.0
        %865 = vmatpush1.msra.mxu0 0.0
        %866 = vmatprep.subr.mxu0 0.0
        %867 = vmatpush1.msra.mxu0 0.0
        %868 = vmatprep.subr.mxu0 0.0
        %869 = vmatpush1.msra.mxu0 0.0
        %870 = vmatprep.subr.mxu0 0.0
        %871 = vmatpush1.msra.mxu0 0.0
        %872 = vmatprep.subr.mxu0 0.0
        %873 = vmatpush1.msra.mxu0 0.0
        %874 = vmatprep.subr.mxu0 0.0
        %875 = vmatpush1.msra.mxu0 0.0
        %876 = vmatprep.subr.mxu0 0.0
        %877 = vmatpush1.msra.mxu0 0.0
        %878 = vmatprep.subr.mxu0 0.0
        %879 = vmatpush1.msra.mxu0 0.0
        %880 = vmatprep.subr.mxu0 0.0
        %881 = vmatpush1.msra.mxu0 0.0
        %882 = vmatprep.subr.mxu0 0.0
        %883 = vmatpush1.msra.mxu0 0.0
        %884 = vmatprep.subr.mxu0 0.0
        %885 = vmatpush1.msra.mxu0 0.0
        %886 = vmatprep.subr.mxu0 0.0
        %887 = vmatpush1.msra.mxu0 0.0
        %888 = vmatprep.subr.mxu0 0.0
        %889 = vmatpush1.msra.mxu0 0.0
        %890 = vmatprep.mubr.f32.mxu0 0.0
        %891 = vmatmul.mubr.f32.gmra.mrb[0].mxu0 %v779
        %v892 = vpop.f32.mrb[0].mxu0
        %v893 = vadd.f32 %v701, %v892
        %v894 = vpop.f32.mrb[0].mxu0
        %v895 = vadd.f32 %v701, %v894
        %896 = vmatprep.mubr.f32.mxu0 0.0
        %897 = vmatmul.mubr.f32.gmra.mrb[0].mxu0 %v782
        %v898 = vpop.f32.mrb[0].mxu0
        %v899 = vadd.f32 %v706, %v898
        %v900 = vpop.f32.mrb[0].mxu0
        %v901 = vadd.f32 %v706, %v900
        %902 = vmatprep.mubr.f32.mxu0 0.0
        %903 = vmatmul.mubr.f32.gmra.mrb[0].mxu0 %v785
        %v904 = vpop.f32.mrb[0].mxu0
        %v905 = vadd.f32 %v711, %v904
        %v906 = vpop.f32.mrb[0].mxu0
        %v907 = vadd.f32 %v711, %v906
        %908 = vmatprep.mubr.f32.mxu0 0.0
        %909 = vmatmul.mubr.f32.gmra.mrb[0].mxu0 %v788
        %v910 = vpop.f32.mrb[0].mxu0
        %v911 = vadd.f32 %v716, %v910
        %v912 = vpop.f32.mrb[0].mxu0
        %v913 = vadd.f32 %v716, %v912
        %914 = vmatprep.mubr.f32.mxu0 0.0
        %915 = vmatmul.mubr.f32.gmra.mrb[0].mxu0 %v791
        %v916 = vpop.f32.mrb[0].mxu0
        %v917 = vadd.f32 %v721, %v916
        %v918 = vpop.f32.mrb[0].mxu0
        %v919 = vadd.f32 %v721, %v918
        %920 = vmatprep.mubr.f32.mxu0 0.0
        %921 = vmatmul.mubr.f32.gmra.mrb[0].mxu0 %v794
        %v922 = vpop.f32.mrb[0].mxu0
        %v923 = vadd.f32 %v726, %v922
        %v924 = vpop.f32.mrb[0].mxu0
        %v925 = vadd.f32 %v726, %v924
        %926 = vmatprep.mubr.f32.mxu0 0.0
        %927 = vmatmul.mubr.f32.gmra.mrb[0].mxu0 %v797
        %v928 = vpop.f32.mrb[0].mxu0
        %v929 = vadd.f32 %v731, %v928
        %v930 = vpop.f32.mrb[0].mxu0
        %v931 = vadd.f32 %v731, %v930
        %932 = vmatprep.mubr.f32.mxu0 0.0
        %933 = vmatmul.mubr.f32.gmra.mrb[0].mxu0 %v800
        %v934 = vpop.f32.mrb[0].mxu0
        %v935 = vadd.f32 %v736, %v934
        %v936 = vpop.f32.mrb[0].mxu0
        %v937 = vadd.f32 %v736, %v936
        %938 = vmatprep.mubr.f32.mxu0 0.0
        %939 = vmatmul.mubr.f32.gmra.mrb[0].mxu0 %v803
        %v940 = vpop.f32.mrb[0].mxu0
        %v941 = vadd.f32 %v741, %v940
        %v942 = vpop.f32.mrb[0].mxu0
        %v943 = vadd.f32 %v741, %v942
        %944 = vmatprep.mubr.f32.mxu0 0.0
        %945 = vmatmul.mubr.f32.gmra.mrb[0].mxu0 %v806
        %v946 = vpop.f32.mrb[0].mxu0
        %v947 = vadd.f32 %v746, %v946
        %v948 = vpop.f32.mrb[0].mxu0
        %v949 = vadd.f32 %v746, %v948
        %950 = vmatprep.mubr.f32.mxu0 0.0
        %951 = vmatmul.mubr.f32.gmra.mrb[0].mxu0 %v809
        %v952 = vpop.f32.mrb[0].mxu0
        %v953 = vadd.f32 %v751, %v952
        %v954 = vpop.f32.mrb[0].mxu0
        %v955 = vadd.f32 %v751, %v954
        %956 = vmatprep.mubr.f32.mxu0 0.0
        %957 = vmatmul.mubr.f32.gmra.mrb[0].mxu0 %v812
        %v958 = vpop.f32.mrb[0].mxu0
        %v959 = vadd.f32 %v756, %v958
        %v960 = vpop.f32.mrb[0].mxu0
        %v961 = vadd.f32 %v756, %v960
        %962 = vmatprep.mubr.f32.mxu0 0.0
        %963 = vmatmul.mubr.f32.gmra.mrb[0].mxu0 %v815
        %v964 = vpop.f32.mrb[0].mxu0
        %v965 = vadd.f32 %v761, %v964
        %v966 = vpop.f32.mrb[0].mxu0
        %v967 = vadd.f32 %v761, %v966
        %968 = vmatprep.mubr.f32.mxu0 0.0
        %969 = vmatmul.mubr.f32.gmra.mrb[0].mxu0 %v818
        %v970 = vpop.f32.mrb[0].mxu0
        %v971 = vadd.f32 %v766, %v970
        %v972 = vpop.f32.mrb[0].mxu0
        %v973 = vadd.f32 %v766, %v972
        %974 = vmatprep.mubr.f32.mxu0 0.0
        %975 = vmatmul.mubr.f32.gmra.mrb[0].mxu0 %v821
        %v976 = vpop.f32.mrb[0].mxu0
        %v977 = vadd.f32 %v771, %v976
        %v978 = vpop.f32.mrb[0].mxu0
        %v979 = vadd.f32 %v771, %v978
        %980 = vmatprep.mubr.f32.mxu0 0.0
        %981 = vmatmul.mubr.f32.gmra.mrb[0].mxu0 %v824
        %v982 = vpop.f32.mrb[0].mxu0
        %v983 = vadd.f32 %v776, %v982
        %v984 = vpop.f32.mrb[0].mxu0
        %v985 = vadd.f32 %v776, %v984
        %986 = vdwg.mxu0
        %v987 = vmul.f32 %v893, 0.5
        %v988 = vmul.f32 %v895, 0.5
        %v989 = vmul.f32 %v899, 0.5
        %v990 = vmul.f32 %v901, 0.5
        %v991 = vmul.f32 %v905, 0.5
        %v992 = vmul.f32 %v907, 0.5
        %v993 = vmul.f32 %v911, 0.5
        %v994 = vmul.f32 %v913, 0.5
        %v995 = vmul.f32 %v917, 0.5
        %v996 = vmul.f32 %v919, 0.5
        %v997 = vmul.f32 %v923, 0.5
        %v998 = vmul.f32 %v925, 0.5
        %v999 = vmul.f32 %v929, 0.5
        %v1000 = vmul.f32 %v931, 0.5
        %v1001 = vmul.f32 %v935, 0.5
        %v1002 = vmul.f32 %v937, 0.5
        %v1003 = vmul.f32 %v941, 0.5
        %v1004 = vmul.f32 %v943, 0.5
        %v1005 = vmul.f32 %v947, 0.5
        %v1006 = vmul.f32 %v949, 0.5
        %v1007 = vmul.f32 %v953, 0.5
        %v1008 = vmul.f32 %v955, 0.5
        %v1009 = vmul.f32 %v959, 0.5
        %v1010 = vmul.f32 %v961, 0.5
        %v1011 = vmul.f32 %v965, 0.5
        %v1012 = vmul.f32 %v967, 0.5
        %v1013 = vmul.f32 %v971, 0.5
        %v1014 = vmul.f32 %v973, 0.5
        %v1015 = vmul.f32 %v977, 0.5
        %v1016 = vmul.f32 %v979, 0.5
        %v1017 = vmul.f32 %v983, 0.5
        %v1018 = vmul.f32 %v985, 0.5
        %v1019 = vmul.f32 %v893, 0.044715
        %v1020 = vmul.f32 %v895, 0.044715
        %v1021 = vmul.f32 %v899, 0.044715
        %v1022 = vmul.f32 %v901, 0.044715
        %v1023 = vmul.f32 %v905, 0.044715
        %v1024 = vmul.f32 %v907, 0.044715
        %v1025 = vmul.f32 %v911, 0.044715
        %v1026 = vmul.f32 %v913, 0.044715
        %v1027 = vmul.f32 %v917, 0.044715
        %v1028 = vmul.f32 %v919, 0.044715
        %v1029 = vmul.f32 %v923, 0.044715
        %v1030 = vmul.f32 %v925, 0.044715
        %v1031 = vmul.f32 %v929, 0.044715
        %v1032 = vmul.f32 %v931, 0.044715
        %v1033 = vmul.f32 %v935, 0.044715
        %v1034 = vmul.f32 %v937, 0.044715
        %v1035 = vmul.f32 %v941, 0.044715
        %v1036 = vmul.f32 %v943, 0.044715
        %v1037 = vmul.f32 %v947, 0.044715
        %v1038 = vmul.f32 %v949, 0.044715
        %v1039 = vmul.f32 %v953, 0.044715
        %v1040 = vmul.f32 %v955, 0.044715
        %v1041 = vmul.f32 %v959, 0.044715
        %v1042 = vmul.f32 %v961, 0.044715
        %v1043 = vmul.f32 %v965, 0.044715
        %v1044 = vmul.f32 %v967, 0.044715
        %v1045 = vmul.f32 %v971, 0.044715
        %v1046 = vmul.f32 %v973, 0.044715
        %v1047 = vmul.f32 %v977, 0.044715
        %v1048 = vmul.f32 %v979, 0.044715
        %v1049 = vmul.f32 %v983, 0.044715
        %v1050 = vmul.f32 %v985, 0.044715
        %v1051 = vmul.f32 %v1019, %v893
        %v1052 = vmul.f32 %v1020, %v895
        %v1053 = vmul.f32 %v1021, %v899
        %v1054 = vmul.f32 %v1022, %v901
        %v1055 = vmul.f32 %v1023, %v905
        %v1056 = vmul.f32 %v1024, %v907
        %v1057 = vmul.f32 %v1025, %v911
        %v1058 = vmul.f32 %v1026, %v913
        %v1059 = vmul.f32 %v1027, %v917
        %v1060 = vmul.f32 %v1028, %v919
        %v1061 = vmul.f32 %v1029, %v923
        %v1062 = vmul.f32 %v1030, %v925
        %v1063 = vmul.f32 %v1031, %v929
        %v1064 = vmul.f32 %v1032, %v931
        %v1065 = vmul.f32 %v1033, %v935
        %v1066 = vmul.f32 %v1034, %v937
        %v1067 = vmul.f32 %v1035, %v941
        %v1068 = vmul.f32 %v1036, %v943
        %v1069 = vmul.f32 %v1037, %v947
        %v1070 = vmul.f32 %v1038, %v949
        %v1071 = vmul.f32 %v1039, %v953
        %v1072 = vmul.f32 %v1040, %v955
        %v1073 = vmul.f32 %v1041, %v959
        %v1074 = vmul.f32 %v1042, %v961
        %v1075 = vmul.f32 %v1043, %v965
        %v1076 = vmul.f32 %v1044, %v967
        %v1077 = vmul.f32 %v1045, %v971
        %v1078 = vmul.f32 %v1046, %v973
        %v1079 = vmul.f32 %v1047, %v977
        %v1080 = vmul.f32 %v1048, %v979
        %v1081 = vmul.f32 %v1049, %v983
        %v1082 = vmul.f32 %v1050, %v985
        %v1083 = vmul.f32 %v1051, %v893
        %v1084 = vmul.f32 %v1052, %v895
        %v1085 = vmul.f32 %v1053, %v899
        %v1086 = vmul.f32 %v1054, %v901
        %v1087 = vmul.f32 %v1055, %v905
        %v1088 = vmul.f32 %v1056, %v907
        %v1089 = vmul.f32 %v1057, %v911
        %v1090 = vmul.f32 %v1058, %v913
        %v1091 = vmul.f32 %v1059, %v917
        %v1092 = vmul.f32 %v1060, %v919
        %v1093 = vmul.f32 %v1061, %v923
        %v1094 = vmul.f32 %v1062, %v925
        %v1095 = vmul.f32 %v1063, %v929
        %v1096 = vmul.f32 %v1064, %v931
        %v1097 = vmul.f32 %v1065, %v935
        %v1098 = vmul.f32 %v1066, %v937
        %v1099 = vmul.f32 %v1067, %v941
        %v1100 = vmul.f32 %v1068, %v943
        %v1101 = vmul.f32 %v1069, %v947
        %v1102 = vmul.f32 %v1070, %v949
        %v1103 = vmul.f32 %v1071, %v953
        %v1104 = vmul.f32 %v1072, %v955
        %v1105 = vmul.f32 %v1073, %v959
        %v1106 = vmul.f32 %v1074, %v961
        %v1107 = vmul.f32 %v1075, %v965
        %v1108 = vmul.f32 %v1076, %v967
        %v1109 = vmul.f32 %v1077, %v971
        %v1110 = vmul.f32 %v1078, %v973
        %v1111 = vmul.f32 %v1079, %v977
        %v1112 = vmul.f32 %v1080, %v979
        %v1113 = vmul.f32 %v1081, %v983
        %v1114 = vmul.f32 %v1082, %v985
        %v1115 = vadd.f32 %v893, %v1083
        %v1116 = vadd.f32 %v895, %v1084
        %v1117 = vadd.f32 %v899, %v1085
        %v1118 = vadd.f32 %v901, %v1086
        %v1119 = vadd.f32 %v905, %v1087
        %v1120 = vadd.f32 %v907, %v1088
        %v1121 = vadd.f32 %v911, %v1089
        %v1122 = vadd.f32 %v913, %v1090
        %v1123 = vadd.f32 %v917, %v1091
        %v1124 = vadd.f32 %v919, %v1092
        %v1125 = vadd.f32 %v923, %v1093
        %v1126 = vadd.f32 %v925, %v1094
        %v1127 = vadd.f32 %v929, %v1095
        %v1128 = vadd.f32 %v931, %v1096
        %v1129 = vadd.f32 %v935, %v1097
        %v1130 = vadd.f32 %v937, %v1098
        %v1131 = vadd.f32 %v941, %v1099
        %v1132 = vadd.f32 %v943, %v1100
        %v1133 = vadd.f32 %v947, %v1101
        %v1134 = vadd.f32 %v949, %v1102
        %v1135 = vadd.f32 %v953, %v1103
        %v1136 = vadd.f32 %v955, %v1104
        %v1137 = vadd.f32 %v959, %v1105
        %v1138 = vadd.f32 %v961, %v1106
        %v1139 = vadd.f32 %v965, %v1107
        %v1140 = vadd.f32 %v967, %v1108
        %v1141 = vadd.f32 %v971, %v1109
        %v1142 = vadd.f32 %v973, %v1110
        %v1143 = vadd.f32 %v977, %v1111
        %v1144 = vadd.f32 %v979, %v1112
        %v1145 = vadd.f32 %v983, %v1113
        %v1146 = vadd.f32 %v985, %v1114
        %v1147 = vmul.f32 %v1115, 0.7978846
        %v1148 = vmul.f32 %v1116, 0.7978846
        %v1149 = vmul.f32 %v1117, 0.7978846
        %v1150 = vmul.f32 %v1118, 0.7978846
        %v1151 = vmul.f32 %v1119, 0.7978846
        %v1152 = vmul.f32 %v1120, 0.7978846
        %v1153 = vmul.f32 %v1121, 0.7978846
        %v1154 = vmul.f32 %v1122, 0.7978846
        %v1155 = vmul.f32 %v1123, 0.7978846
        %v1156 = vmul.f32 %v1124, 0.7978846
        %v1157 = vmul.f32 %v1125, 0.7978846
        %v1158 = vmul.f32 %v1126, 0.7978846
        %v1159 = vmul.f32 %v1127, 0.7978846
        %v1160 = vmul.f32 %v1128, 0.7978846
        %v1161 = vmul.f32 %v1129, 0.7978846
        %v1162 = vmul.f32 %v1130, 0.7978846
        %v1163 = vmul.f32 %v1131, 0.7978846
        %v1164 = vmul.f32 %v1132, 0.7978846
        %v1165 = vmul.f32 %v1133, 0.7978846
        %v1166 = vmul.f32 %v1134, 0.7978846
        %v1167 = vmul.f32 %v1135, 0.7978846
        %v1168 = vmul.f32 %v1136, 0.7978846
        %v1169 = vmul.f32 %v1137, 0.7978846
        %v1170 = vmul.f32 %v1138, 0.7978846
        %v1171 = vmul.f32 %v1139, 0.7978846
        %v1172 = vmul.f32 %v1140, 0.7978846
        %v1173 = vmul.f32 %v1141, 0.7978846
        %v1174 = vmul.f32 %v1142, 0.7978846
        %v1175 = vmul.f32 %v1143, 0.7978846
        %v1176 = vmul.f32 %v1144, 0.7978846
        %v1177 = vmul.f32 %v1145, 0.7978846
        %v1178 = vmul.f32 %v1146, 0.7978846
        %v1179 = vtanh.pop %v1147
        %v1180 = vtanh.pop %v1148
        %v1181 = vtanh.pop %v1149
        %v1182 = vtanh.pop %v1150
        %v1183 = vtanh.pop %v1151
        %v1184 = vtanh.pop %v1152
        %v1185 = vtanh.pop %v1153
        %v1186 = vtanh.pop %v1154
        %v1187 = vtanh.pop %v1155
        %v1188 = vtanh.pop %v1156
        %v1189 = vtanh.pop %v1157
        %v1190 = vtanh.pop %v1158
        %v1191 = vtanh.pop %v1159
        %v1192 = vtanh.pop %v1160
        %v1193 = vtanh.pop %v1161
        %v1194 = vtanh.pop %v1162
        %v1195 = vtanh.pop %v1163
        %v1196 = vtanh.pop %v1164
        %v1197 = vtanh.pop %v1165
        %v1198 = vtanh.pop %v1166
        %v1199 = vtanh.pop %v1167
        %v1200 = vtanh.pop %v1168
        %v1201 = vtanh.pop %v1169
        %v1202 = vtanh.pop %v1170
        %v1203 = vtanh.pop %v1171
        %v1204 = vtanh.pop %v1172
        %v1205 = vtanh.pop %v1173
        %v1206 = vtanh.pop %v1174
        %v1207 = vtanh.pop %v1175
        %v1208 = vtanh.pop %v1176
        %v1209 = vtanh.pop %v1177
        %v1210 = vtanh.pop %v1178
        %v1211 = vadd.f32 %v1179, 1.0
        %v1212 = vadd.f32 %v1180, 1.0
        %v1213 = vadd.f32 %v1181, 1.0
        %v1214 = vadd.f32 %v1182, 1.0
        %v1215 = vadd.f32 %v1183, 1.0
        %v1216 = vadd.f32 %v1184, 1.0
        %v1217 = vadd.f32 %v1185, 1.0
        %v1218 = vadd.f32 %v1186, 1.0
        %v1219 = vadd.f32 %v1187, 1.0
        %v1220 = vadd.f32 %v1188, 1.0
        %v1221 = vadd.f32 %v1189, 1.0
        %v1222 = vadd.f32 %v1190, 1.0
        %v1223 = vadd.f32 %v1191, 1.0
        %v1224 = vadd.f32 %v1192, 1.0
        %v1225 = vadd.f32 %v1193, 1.0
        %v1226 = vadd.f32 %v1194, 1.0
        %v1227 = vadd.f32 %v1195, 1.0
        %v1228 = vadd.f32 %v1196, 1.0
        %v1229 = vadd.f32 %v1197, 1.0
        %v1230 = vadd.f32 %v1198, 1.0
        %v1231 = vadd.f32 %v1199, 1.0
        %v1232 = vadd.f32 %v1200, 1.0
        %v1233 = vadd.f32 %v1201, 1.0
        %v1234 = vadd.f32 %v1202, 1.0
        %v1235 = vadd.f32 %v1203, 1.0
        %v1236 = vadd.f32 %v1204, 1.0
        %v1237 = vadd.f32 %v1205, 1.0
        %v1238 = vadd.f32 %v1206, 1.0
        %v1239 = vadd.f32 %v1207, 1.0
        %v1240 = vadd.f32 %v1208, 1.0
        %v1241 = vadd.f32 %v1209, 1.0
        %v1242 = vadd.f32 %v1210, 1.0
        %v1243 = vmul.f32 %v987, %v1211
        %v1244 = vmul.f32 %v988, %v1212
        %v1245 = vmul.f32 %v989, %v1213
        %v1246 = vmul.f32 %v990, %v1214
        %v1247 = vmul.f32 %v991, %v1215
        %v1248 = vmul.f32 %v992, %v1216
        %v1249 = vmul.f32 %v993, %v1217
        %v1250 = vmul.f32 %v994, %v1218
        %v1251 = vmul.f32 %v995, %v1219
        %v1252 = vmul.f32 %v996, %v1220
        %v1253 = vmul.f32 %v997, %v1221
        %v1254 = vmul.f32 %v998, %v1222
        %v1255 = vmul.f32 %v999, %v1223
        %v1256 = vmul.f32 %v1000, %v1224
        %v1257 = vmul.f32 %v1001, %v1225
        %v1258 = vmul.f32 %v1002, %v1226
        %v1259 = vmul.f32 %v1003, %v1227
        %v1260 = vmul.f32 %v1004, %v1228
        %v1261 = vmul.f32 %v1005, %v1229
        %v1262 = vmul.f32 %v1006, %v1230
        %v1263 = vmul.f32 %v1007, %v1231
        %v1264 = vmul.f32 %v1008, %v1232
        %v1265 = vmul.f32 %v1009, %v1233
        %v1266 = vmul.f32 %v1010, %v1234
        %v1267 = vmul.f32 %v1011, %v1235
        %v1268 = vmul.f32 %v1012, %v1236
        %v1269 = vmul.f32 %v1013, %v1237
        %v1270 = vmul.f32 %v1014, %v1238
        %v1271 = vmul.f32 %v1015, %v1239
        %v1272 = vmul.f32 %v1016, %v1240
        %v1273 = vmul.f32 %v1017, %v1241
        %v1274 = vmul.f32 %v1018, %v1242
        %v1275 = vmul.f32 %v570, %v1243
        %v1276 = vmul.f32 %v572, %v1244
        %v1277 = vmul.f32 %v576, %v1245
        %v1278 = vmul.f32 %v578, %v1246
        %v1279 = vmul.f32 %v582, %v1247
        %v1280 = vmul.f32 %v584, %v1248
        %v1281 = vmul.f32 %v588, %v1249
        %v1282 = vmul.f32 %v590, %v1250
        %v1283 = vmul.f32 %v594, %v1251
        %v1284 = vmul.f32 %v596, %v1252
        %v1285 = vmul.f32 %v600, %v1253
        %v1286 = vmul.f32 %v602, %v1254
        %v1287 = vmul.f32 %v606, %v1255
        %v1288 = vmul.f32 %v608, %v1256
        %v1289 = vmul.f32 %v612, %v1257
        %v1290 = vmul.f32 %v614, %v1258
        %v1291 = vmul.f32 %v618, %v1259
        %v1292 = vmul.f32 %v620, %v1260
        %v1293 = vmul.f32 %v624, %v1261
        %v1294 = vmul.f32 %v626, %v1262
        %v1295 = vmul.f32 %v630, %v1263
        %v1296 = vmul.f32 %v632, %v1264
        %v1297 = vmul.f32 %v636, %v1265
        %v1298 = vmul.f32 %v638, %v1266
        %v1299 = vmul.f32 %v642, %v1267
        %v1300 = vmul.f32 %v644, %v1268
        %v1301 = vmul.f32 %v648, %v1269
        %v1302 = vmul.f32 %v650, %v1270
        %v1303 = vmul.f32 %v654, %v1271
        %v1304 = vmul.f32 %v656, %v1272
        %v1305 = vmul.f32 %v660, %v1273
        %v1306 = vmul.f32 %v662, %v1274
        %v1307 = vld [vmem:[#allocation2] sm:$0xff]
        %v1308 = vld [vmem:[#allocation2 + $0x8] sm:$0xff]
        %v1309 = vld [vmem:[#allocation2 + $0x10] sm:$0xff]
        %v1310 = vld [vmem:[#allocation2 + $0x18] sm:$0xff]
        %v1311 = vld [vmem:[#allocation2 + $0x20] sm:$0xff]
        %v1312 = vld [vmem:[#allocation2 + $0x28] sm:$0xff]
        %v1313 = vld [vmem:[#allocation2 + $0x30] sm:$0xff]
        %v1314 = vld [vmem:[#allocation2 + $0x38] sm:$0xff]
        %v1315 = vld [vmem:[%s314] sm:$0xff]
        %v1316 = vld [vmem:[%s314 + $0x8] sm:$0xff]
        %v1317 = vld [vmem:[%s314 + $0x10] sm:$0xff]
        %v1318 = vld [vmem:[%s314 + $0x18] sm:$0xff]
        %1319 = vmatprep.subr.mxu0 %v1276
        %1320 = vmatpush1.msra.mxu0 %v1275
        %1321 = vmatprep.subr.mxu0 %v1278
        %1322 = vmatpush1.msra.mxu0 %v1277
        %1323 = vmatprep.subr.mxu0 %v1280
        %1324 = vmatpush1.msra.mxu0 %v1279
        %1325 = vmatprep.subr.mxu0 %v1282
        %1326 = vmatpush1.msra.mxu0 %v1281
        %1327 = vmatprep.subr.mxu0 %v1284
        %1328 = vmatpush1.msra.mxu0 %v1283
        %1329 = vmatprep.subr.mxu0 %v1286
        %1330 = vmatpush1.msra.mxu0 %v1285
        %1331 = vmatprep.subr.mxu0 %v1288
        %1332 = vmatpush1.msra.mxu0 %v1287
        %1333 = vmatprep.subr.mxu0 %v1290
        %1334 = vmatpush1.msra.mxu0 %v1289
        %1335 = vmatprep.subr.mxu0 %v1292
        %1336 = vmatpush1.msra.mxu0 %v1291
        %1337 = vmatprep.subr.mxu0 %v1294
        %1338 = vmatpush1.msra.mxu0 %v1293
        %1339 = vmatprep.subr.mxu0 %v1296
        %1340 = vmatpush1.msra.mxu0 %v1295
        %1341 = vmatprep.subr.mxu0 %v1298
        %1342 = vmatpush1.msra.mxu0 %v1297
        %1343 = vmatprep.subr.mxu0 %v1300
        %1344 = vmatpush1.msra.mxu0 %v1299
        %1345 = vmatprep.subr.mxu0 %v1302
        %1346 = vmatpush1.msra.mxu0 %v1301
        %1347 = vmatprep.subr.mxu0 %v1304
        %1348 = vmatpush1.msra.mxu0 %v1303
        %1349 = vmatprep.subr.mxu0 %v1306
        %1350 = vmatpush1.msra.mxu0 %v1305
        %1351 = vmatprep.subr.mxu0 0.0
        %1352 = vmatpush1.msra.mxu0 0.0
        %1353 = vmatprep.subr.mxu0 0.0
        %1354 = vmatpush1.msra.mxu0 0.0
        %1355 = vmatprep.subr.mxu0 0.0
        %1356 = vmatpush1.msra.mxu0 0.0
        %1357 = vmatprep.subr.mxu0 0.0
        %1358 = vmatpush1.msra.mxu0 0.0
        %1359 = vmatprep.subr.mxu0 0.0
        %1360 = vmatpush1.msra.mxu0 0.0
        %1361 = vmatprep.subr.mxu0 0.0
        %1362 = vmatpush1.msra.mxu0 0.0
        %1363 = vmatprep.subr.mxu0 0.0
        %1364 = vmatpush1.msra.mxu0 0.0
        %1365 = vmatprep.subr.mxu0 0.0
        %1366 = vmatpush1.msra.mxu0 0.0
        %1367 = vmatprep.subr.mxu0 0.0
        %1368 = vmatpush1.msra.mxu0 0.0
        %1369 = vmatprep.subr.mxu0 0.0
        %1370 = vmatpush1.msra.mxu0 0.0
        %1371 = vmatprep.subr.mxu0 0.0
        %1372 = vmatpush1.msra.mxu0 0.0
        %1373 = vmatprep.subr.mxu0 0.0
        %1374 = vmatpush1.msra.mxu0 0.0
        %1375 = vmatprep.subr.mxu0 0.0
        %1376 = vmatpush1.msra.mxu0 0.0
        %1377 = vmatprep.subr.mxu0 0.0
        %1378 = vmatpush1.msra.mxu0 0.0
        %1379 = vmatprep.subr.mxu0 0.0
        %1380 = vmatpush1.msra.mxu0 0.0
        %1381 = vmatprep.subr.mxu0 0.0
        %1382 = vmatpush1.msra.mxu0 0.0
        %1383 = vmatprep.mubr.f32.mxu0 0.0
        %1384 = vmatmul.mubr.f32.gmra.mrb[0].mxu0 %v1315
        %v1385 = vpop.f32.mrb[0].mxu0
        %v1386 = vadd.f32 0.0, %v1385
        %v1387 = vpop.f32.mrb[0].mxu0
        %v1388 = vadd.f32 0.0, %v1387
        %1389 = vmatprep.mubr.f32.mxu0 0.0
        %1390 = vmatmul.mubr.f32.gmra.mrb[0].mxu0 %v1316
        %v1391 = vpop.f32.mrb[0].mxu0
        %v1392 = vadd.f32 0.0, %v1391
        %v1393 = vpop.f32.mrb[0].mxu0
        %v1394 = vadd.f32 0.0, %v1393
        %1395 = vmatprep.mubr.f32.mxu0 0.0
        %1396 = vmatmul.mubr.f32.gmra.mrb[0].mxu0 %v1317
        %v1397 = vpop.f32.mrb[0].mxu0
        %v1398 = vadd.f32 0.0, %v1397
        %v1399 = vpop.f32.mrb[0].mxu0
        %v1400 = vadd.f32 0.0, %v1399
        %1401 = vmatprep.mubr.f32.mxu0 0.0
        %1402 = vmatmul.mubr.f32.gmra.mrb[0].mxu0 %v1318
        %v1403 = vpop.f32.mrb[0].mxu0
        %v1404 = vadd.f32 0.0, %v1403
        %v1405 = vpop.f32.mrb[0].mxu0
        %v1406 = vadd.f32 0.0, %v1405
        %1407 = vdwg.mxu0
        %v1408 = vadd.f32 %v1307, %v1386
        %v1409 = vadd.f32 %v1308, %v1388
        %v1410 = vadd.f32 %v1309, %v1392
        %v1411 = vadd.f32 %v1310, %v1394
        %v1412 = vadd.f32 %v1311, %v1398
        %v1413 = vadd.f32 %v1312, %v1400
        %v1414 = vadd.f32 %v1313, %v1404
        %v1415 = vadd.f32 %v1314, %v1406
        %1416 = vst [vmem:[#allocation2] sm:$0xff] %v1408
        %1417 = vst [vmem:[#allocation2 + $0x8] sm:$0xff] %v1409
        %1418 = vst [vmem:[#allocation2 + $0x10] sm:$0xff] %v1410
        %1419 = vst [vmem:[#allocation2 + $0x18] sm:$0xff] %v1411
        %1420 = vst [vmem:[#allocation2 + $0x20] sm:$0xff] %v1412
        %1421 = vst [vmem:[#allocation2 + $0x28] sm:$0xff] %v1413
        %1422 = vst [vmem:[#allocation2 + $0x30] sm:$0xff] %v1414
        %1423 = vst [vmem:[#allocation2 + $0x38] sm:$0xff] %v1415
        // Predicated region
        $region45: #{tpu_custom_call.1} parent=39 // pred_check
          %p1424 = pneg %p322
        $region46: #{tpu_custom_call.1} parent=39 // pred_check_branch
          %1426 = sbr.rel (%p1424) target = $region48
        $region47: #{tpu_custom_call.1} parent=39 // pred_region
          %v1427 = vld [vmem:[#allocation2] sm:$0xff]
          %v1428 = vld [vmem:[#allocation2 + $0x8] sm:$0xff]
          %v1429 = vld [vmem:[#allocation2 + $0x10] sm:$0xff]
          %v1430 = vld [vmem:[#allocation2 + $0x18] sm:$0xff]
          %v1431 = vld [vmem:[#allocation2 + $0x20] sm:$0xff]
          %v1432 = vld [vmem:[#allocation2 + $0x28] sm:$0xff]
          %v1433 = vld [vmem:[#allocation2 + $0x30] sm:$0xff]
          %v1434 = vld [vmem:[#allocation2 + $0x38] sm:$0xff]
          %v1435 = vld [vmem:[%s4] sm:$0xff]
          %v1436 = vld [vmem:[%s4 + $0x8] sm:$0xff]
          %v1437 = vld [vmem:[%s4 + $0x10] sm:$0xff]
          %v1438 = vld [vmem:[%s4 + $0x18] sm:$0xff]
          %1440 = vset.pattern.permute.xlu0 0
          %1441 = vperm.xlu0 %1440, %v1435
          %v1442 = vpop.permute.xlu0 %1441
          %1445 = vset.pattern.permute.xlu0 0
          %1446 = vperm.xlu0 %1445, %v1436
          %v1447 = vpop.permute.xlu0 %1446
          %1450 = vset.pattern.permute.xlu0 0
          %1451 = vperm.xlu0 %1450, %v1437
          %v1452 = vpop.permute.xlu0 %1451
          %1455 = vset.pattern.permute.xlu0 0
          %1456 = vperm.xlu0 %1455, %v1438
          %v1457 = vpop.permute.xlu0 %1456
          %v1459 = vadd.f32 %v1427, %v1442
          %v1460 = vadd.f32 %v1428, %v1442
          %v1461 = vadd.f32 %v1429, %v1447
          %v1462 = vadd.f32 %v1430, %v1447
          %v1463 = vadd.f32 %v1431, %v1452
          %v1464 = vadd.f32 %v1432, %v1452
          %v1465 = vadd.f32 %v1433, %v1457
          %v1466 = vadd.f32 %v1434, %v1457
          %1467 = vst [vmem:[%s294] sm:$0xff] %v1459
          %1468 = vst [vmem:[%s294 + $0x8] sm:$0xff] %v1460
          %1469 = vst [vmem:[%s294 + $0x10] sm:$0xff] %v1461
          %1470 = vst [vmem:[%s294 + $0x18] sm:$0xff] %v1462
          %1471 = vst [vmem:[%s294 + $0x20] sm:$0xff] %v1463
          %1472 = vst [vmem:[%s294 + $0x28] sm:$0xff] %v1464
          %1473 = vst [vmem:[%s294 + $0x30] sm:$0xff] %v1465
          %1474 = vst [vmem:[%s294 + $0x38] sm:$0xff] %v1466
        $region48: #{tpu_custom_call.1} parent=39 // pred_fallthru
          _
        %s1475 = sand.u32 %s175, 1
        %s1476 = scalar_lea.sflag [#allocation4], %s1475
        %s1477 = sand.u32 %s175, 1
        %s1478 = smul.addr %s1477, 64
        %s1479 = scalar_lea.vmem [#allocation3], %s1478
        // Predicated region
        $region49: #{tpu_custom_call.1} parent=39 // pred_check
          %p1480 = pneg %p185
        $region50: #{tpu_custom_call.1} parent=39 // pred_check_branch
          %1482 = sbr.rel (%p1480) target = $region52
        $region51: #{tpu_custom_call.1} parent=39 // pred_region
          %s1483 = smul.u32 2, %s25
          %s1485 = ssub.s32 1024, 1024
          %1486 = vsyncadd %s1476, %s1485
          %s1487 = smul.addr %s24, 8
          %s1488 = sadd.s32 %s1483, %s1487
          %s1489 = smul.addr %s1488, 128
          %s1490 = scalar_lea.hbm %s5, %s1489
          %s1491 = sshll.u32 %s1479, 4
          %s1492 = int_to_ptr.vmem [resolvable:$true] %s1491
          %1497 = dma.vmem_to_hbm [thread:$0]  %s1492, 1024, %s1490, %s1476, 256, 256, 16
        $region52: #{tpu_custom_call.1} parent=39 // pred_fallthru
          _
      $region40: #{tpu_custom_call.1} parent=5 // pred_fallthru
        _
      %p1498 = scmp.le.s32.totalorder 2, %s14
      // Predicated region
      $region53: #{tpu_custom_call.1} parent=5 // pred_check
        %p1499 = pneg %p1498
      $region54: #{tpu_custom_call.1} parent=5 // pred_check_branch
        %1501 = sbr.rel (%p1499) target = $region56
      $region55: #{tpu_custom_call.1} parent=5 // pred_region
        %s1502 = ssub.s32 %s14, 2
        // Predicated region
        $region57: #{tpu_custom_call.1} parent=55 // pred_check
          %p1503 = pneg %p191
        $region58: #{tpu_custom_call.1} parent=55 // pred_check_branch
          %1505 = sbr.rel (%p1503) target = $region60
        $region59: #{tpu_custom_call.1} parent=55 // pred_region
          %s1506 = sand.u32 %s176, 1
          %s1507 = scalar_lea.sflag [#allocation4], %s1506
          %s1508 = sand.u32 %s176, 1
          %s1509 = smul.addr %s1508, 64
          %s1510 = scalar_lea.vmem [#allocation3], %s1509
          %1511 = dma.done %s1507, 1024
        $region60: #{tpu_custom_call.1} parent=55 // pred_fallthru
          _
      $region56: #{tpu_custom_call.1} parent=5 // pred_fallthru
        _
    $region6: #{tpu_custom_call.1} parent=1 // loop_footer
      %s18 = sadd.s32 1, %s14
    $region7: #{tpu_custom_call.1} parent=1 // loop_footer_branch
      %13 = sbr.rel target = $region3
    $region8: #{tpu_custom_call.1} parent=1 // loop_exit
      _
    %1512 = vsyncpa [#allocation4], 1
    %s1513 = scalar_lea.sflag [#allocation4], 1
    %1514 = vsyncpa %s1513, 1

</llo_original>
